<compile_context>
chip_gen: v7x
topology: tpu7x:2x2x1
jax: 0.10.0
libtpu: 0.0.40
codegen_flags: <defaults>
</compile_context>

<pallas_src>
import functools

import jax
import jax.numpy as jnp
from jax.experimental import pallas as pl
from jax.experimental.pallas import tpu as pltpu

EPS = 1e-8      # GroupNorm eps (the reference model passes eps=1e-08 explicitly)
LANE = 128


# ---------------------------------------------------------------- kernel utils
def _prelu(x, a):
    return jnp.where(x > 0, x, a * x)


def _gn_norm(x, inv_n, tmask, shift=None):
    """Normalize-only GroupNorm(1, C) over one (C, Tp) tile.

    Single-pass sum / sum-of-squares statistics; inv_n = 1 / (C * T_valid).
    If the time axis is zero-padded (T < Tp) the statistics are masked to the
    valid columns.  The affine transform is folded into neighbouring linear
    ops offline; `shift` carries the residual per-channel bias when needed."""
    xm = x if tmask is None else jnp.where(tmask, x, 0.0)
    s = jnp.sum(xm)
    ss = jnp.sum(xm * xm)
    mu = s * inv_n
    var = jnp.maximum(ss * inv_n - mu * mu, 0.0)
    y = (x - mu) * jax.lax.rsqrt(var + EPS)
    return y if shift is None else y + shift


# --------------------------------------------------------------------- kernel
def _tcn_kernel(x_ref, alpha_ref,
                bnw_ref, bnb_ref, ow_ref, ob_ref,
                w1_ref, b1_ref, s1_ref, dw_ref, db_ref, pw_ref, pb_ref,
                y_ref,
                act_ref, skip_ref,
                *, nb, layer, ksize, dilated, T, inv_n_in, inv_n_hid):
    blk = pl.program_id(1)
    C, Tp = act_ref.shape
    t_idx = jax.lax.broadcasted_iota(jnp.int32, (1, Tp), 1)   # hoisted once
    tmask = (t_idx < T) if T != Tp else None

    # ------------- front: GroupNorm(1, Cin) + 1x1 conv Cin -> BN_dim ---------
    # (LN affine is folded into bnw/bnb offline, so only normalize here.)
    @pl.when(blk == 0)
    def _front():
        xn = _gn_norm(x_ref[0], inv_n_in, tmask)
        a0 = (jnp.dot(bnw_ref[...], xn.astype(jnp.bfloat16),
                      preferred_element_type=jnp.float32) + bnb_ref[...])
        # zero padded columns so garbage can't accumulate across blocks
        act_ref[...] = a0 if tmask is None else jnp.where(tmask, a0, 0.0)
        skip_ref[...] = jnp.zeros_like(skip_ref)

    # ------------- DepthConv1d block -----------------------------------------
    a1 = alpha_ref[2 * blk]
    a2 = alpha_ref[2 * blk + 1]

    act = act_ref[...]                                         # (C, Tp) f32
    h = (jnp.dot(w1_ref[0], act.astype(jnp.bfloat16),
                 preferred_element_type=jnp.float32) + b1_ref[0])
    # GN1: scale folded into the depthwise weights; equivalent shift g1b/g1w.
    h = _gn_norm(_prelu(h, a1), inv_n_hid, tmask, shift=s1_ref[0])

    dw = dw_ref[0]                                             # (H, ksize) f32

    # depthwise conv: groups=H, kernel=3, padding == dilation == d (same-length
    # output, matching the reference).  Centre tap (off == 0) is dilation-
    # independent and hoisted out of the per-dilation branches; boundary taps
    # use static lane rolls + masks inside a value-returning lax.switch.
    centre = h * dw[:, 1:2]

    def _boundary(hh, d):
        acc = None
        for k in range(ksize):
            off = k * d - d
            if off == 0:
                continue
            shifted = pltpu.roll(hh, shift=(-off) % Tp, axis=1)
            m = (t_idx >= -off) if off < 0 else (t_idx < T - off)
            tap = jnp.where(m, shifted, 0.0) * dw[:, k:k + 1]
            acc = tap if acc is None else acc + tap
        return acc

    if dilated and layer > 1:
        li = blk % layer                       # per-block dilation = 2**li
        branches = [(lambda hh, d=2 ** l: _boundary(hh, d))
                    for l in range(layer)]
        bt = jax.lax.switch(li, branches, h)
    else:
        bt = _boundary(h, 1)

    h2 = centre + bt + db_ref[0]
    # GN2: affine folded into the residual/skip projection -> normalize only.
    h2 = _gn_norm(_prelu(h2, a2), inv_n_hid, tmask)

    # fused residual+skip 1x1 projections: one (2C, H) @ (H, Tp) matmul
    proj = (jnp.dot(pw_ref[0], h2.astype(jnp.bfloat16),
                    preferred_element_type=jnp.float32) + pb_ref[0])
    if tmask is not None:
        proj = jnp.where(tmask, proj, 0.0)     # keep padded columns clean

    skip_ref[...] = skip_ref[...] + proj[C:]                   # skip accumulate

    @pl.when(blk < nb - 1)               # last block has no residual branch
    def _residual():
        act_ref[...] = act + proj[:C]

    # ------------- head: PReLU + 1x1 conv BN_dim -> output_dim ---------------
    @pl.when(blk == nb - 1)
    def _head():
        s = _prelu(skip_ref[...], alpha_ref[2 * nb])
        y_ref[0] = (jnp.dot(ow_ref[...], s.astype(jnp.bfloat16),
                            preferred_element_type=jnp.float32) + ob_ref[...])


# -------------------------------------------------------------------- wrapper
def _full(shape):
    return pl.BlockSpec(shape, lambda b, k: (0,) * len(shape))


def _per_block(shape):
    return pl.BlockSpec((1,) + shape, lambda b, k: (k,) + (0,) * len(shape))


def _vmem_limit_bytes(Cin, C, H, Cout, Tp, ksize):
    """Explicit scoped-VMEM budget: scratch + double-buffered blocks + temps."""
    f32, bf16 = 4, 2
    scratch = 2 * C * Tp * f32                                 # act + skip
    io = 2 * Cin * Tp * f32 + 2 * Cout * Tp * f32              # x / y blocks (2x)
    wblk = (H * C * bf16 + 3 * H * f32 + H * ksize * f32
            + 2 * C * H * bf16 + 2 * C * f32)                  # per-block weights
    weights = 2 * wblk + C * Cin * bf16 + Cout * C * bf16 + (C + Cout) * f32
    temps = (6 * H + 5 * C) * Tp * f32                         # h/tap/proj live set
    est = int(1.25 * (scratch + io + weights + temps)) + (1 << 20)
    return int(min(max(est, 32 << 20), 96 << 20))


def tcn_forward(x, params, *, layer, stack, ksize=3, dilated=True):
    """Fused TCN forward pass (skip=True path, as used by TasNet)."""
    assert ksize == 3, "reference DepthConv1d uses kernel=3 (padding==dilation)"
    B, Cin, T = x.shape
    Tp = ((T + LANE - 1) // LANE) * LANE            # lane-dense time axis
    if Tp != T:
        x = jnp.pad(x, ((0, 0), (0, 0), (0, Tp - T)))
    nb = layer * stack
    C = params["bn_w"].shape[0]                     # BN_dim
    H = params["w1"].shape[1]                       # hidden_dim
    Cout = params["out_w"].shape[0]

    kern = functools.partial(
        _tcn_kernel, nb=nb, layer=layer, ksize=ksize, dilated=dilated,
        T=T, inv_n_in=1.0 / (Cin * T), inv_n_hid=1.0 / (H * T))

    y = pl.pallas_call(
        kern,
        out_shape=jax.ShapeDtypeStruct((B, Cout, Tp), jnp.float32),
        grid=(B, nb),
        in_specs=[
            pl.BlockSpec((1, Cin, Tp), lambda b, k: (b, 0, 0)),    # x (blk 0)
            pl.BlockSpec(memory_space=pltpu.MemorySpace.SMEM),     # PReLU alphas
            _full((C, Cin)), _full((C, 1)),                        # BN conv (LN folded)
            _full((Cout, C)), _full((Cout, 1)),                    # head conv
            _per_block((H, C)), _per_block((H, 1)),                # conv1d
            _per_block((H, 1)),                                    # GN1 shift
            _per_block((H, ksize)), _per_block((H, 1)),            # depthwise
            _per_block((2 * C, H)), _per_block((2 * C, 1)),        # res+skip proj
        ],
        out_specs=pl.BlockSpec((1, Cout, Tp), lambda b, k: (b, 0, 0)),
        scratch_shapes=[pltpu.VMEM((C, Tp), jnp.float32),   # running activation
                        pltpu.VMEM((C, Tp), jnp.float32)],  # skip accumulator
        compiler_params=pltpu.CompilerParams(
            dimension_semantics=("parallel", "arbitrary"),
            vmem_limit_bytes=_vmem_limit_bytes(Cin, C, H, Cout, Tp, ksize)),
    )(x, params["alphas"],
      params["bn_w"], params["bn_b"], params["out_w"], params["out_b"],
      params["w1"], params["b1"], params["s1"],
      params["dw"], params["db"], params["pw"], params["pb"])
    return y[:, :, :T] if Tp != T else y


# ---------------------------------------------------------------------- params
def init_raw_tcn_params(key, input_dim, output_dim, BN_dim, hidden_dim,
                        layer, stack, ksize):
    """PyTorch-style (unfused) parameters of TCN(skip=True)."""
    nb = layer * stack
    cnt = [0]

    def nrm(shape, scale=0.1):
        cnt[0] += 1
        return scale * jax.random.normal(jax.random.fold_in(key, cnt[0]),
                                         shape, jnp.float32)

    p = {}
    p["ln_w"] = 1.0 + nrm((input_dim,))          # GroupNorm(1, input_dim)
    p["ln_b"] = nrm((input_dim,))
    p["bn_w"] = nrm((BN_dim, input_dim))         # Conv1d(input_dim, BN_dim, 1)
    p["bn_b"] = nrm((BN_dim,))
    p["out_w"] = nrm((output_dim, BN_dim))       # head Conv1d(BN_dim, out, 1)
    p["out_b"] = nrm((output_dim,))
    p["w1"] = nrm((nb, hidden_dim, BN_dim))      # conv1d
    p["b1"] = nrm((nb, hidden_dim))
    p["g1w"] = 1.0 + nrm((nb, hidden_dim))       # reg1 (GroupNorm(1,H))
    p["g1b"] = nrm((nb, hidden_dim))
    p["dw"] = nrm((nb, hidden_dim, ksize))       # dconv1d (groups=H)
    p["db"] = nrm((nb, hidden_dim))
    p["g2w"] = 1.0 + nrm((nb, hidden_dim))       # reg2
    p["g2b"] = nrm((nb, hidden_dim))
    p["rw"] = nrm((nb, BN_dim, hidden_dim)).at[nb - 1].set(0.0)   # res_out
    p["rb"] = nrm((nb, BN_dim)).at[nb - 1].set(0.0)               # (last: none)
    p["sw"] = nrm((nb, BN_dim, hidden_dim))      # skip_out
    p["sb"] = nrm((nb, BN_dim))
    # PReLU alphas: [2i]=block-i alpha1, [2i+1]=block-i alpha2, [-1]=head alpha
    p["alphas"] = 0.25 + nrm((2 * nb + 1,), 0.05)
    return p


def fold_tcn_params(raw):
    """Fold GroupNorm affines into adjacent linear ops (exact) + bf16 weights."""
    p = {}
    # front: LN affine folded into the bottleneck conv
    p["bn_w"] = (raw["bn_w"] * raw["ln_w"][None, :]).astype(jnp.bfloat16)
    p["bn_b"] = (raw["bn_b"] + raw["bn_w"] @ raw["ln_b"])[:, None]
    # head
    p["out_w"] = raw["out_w"].astype(jnp.bfloat16)
    p["out_b"] = raw["out_b"][:, None]
    # per-block
    p["w1"] = raw["w1"].astype(jnp.bfloat16)
    p["b1"] = raw["b1"][..., None]
    # GN1: scale into depthwise weights; bias as equivalent shift g1b/g1w
    # (exact because the depthwise zero-padding is preserved; needs g1w != 0).
    p["dw"] = raw["dw"] * raw["g1w"][..., None]
    p["s1"] = (raw["g1b"] / raw["g1w"])[..., None]
    p["db"] = raw["db"][..., None]
    # fused residual+skip projection with GN2 affine folded in:
    #   pw' = [rw;sw] * diag(g2w),  pb' = [rb;sb] + [rw;sw] @ g2b
    pw = jnp.concatenate([raw["rw"], raw["sw"]], axis=1)        # (nb, 2C, H)
    pb = jnp.concatenate([raw["rb"], raw["sb"]], axis=1)        # (nb, 2C)
    pb = pb + jnp.einsum('nch,nh->nc', pw, raw["g2b"])
    pw = pw * raw["g2w"][:, None, :]
    p["pw"] = pw.astype(jnp.bfloat16)
    p["pb"] = pb[..., None]
    p["alphas"] = raw["alphas"]
    return p


# ------------------------------------------------------------------- reference
def tcn_reference(x, raw, *, layer, stack, ksize=3, dilated=True):
    """Pure-JAX/XLA re-implementation of the PyTorch TCN (skip=True) forward."""
    B, Cin, T = x.shape
    nb = layer * stack

    def gn(v, w, b):
        mu = jnp.mean(v, axis=(1, 2), keepdims=True)
        var = jnp.mean((v - mu) ** 2, axis=(1, 2), keepdims=True)
        return (v - mu) * jax.lax.rsqrt(var + EPS) * w[None, :, None] + b[None, :, None]

    def prelu(v, a):
        return jnp.where(v > 0, v, a * v)

    def conv1x1(v, w, b):
        return jnp.einsum('oc,bct->bot', w, v) + b[None, :, None]

    def dconv(v, w, b, d):
        vp = jnp.pad(v, ((0, 0), (0, 0), (d, d)))
        out = None
        for k in range(ksize):
            tap = w[None, :, k:k + 1] * jax.lax.dynamic_slice_in_dim(vp, k * d, T, axis=2)
            out = tap if out is None else out + tap
        return out + b[None, :, None]

    out = conv1x1(gn(x, raw["ln_w"], raw["ln_b"]), raw["bn_w"], raw["bn_b"])
    skip = jnp.zeros_like(out)
    for i in range(nb):
        d = 2 ** (i % layer) if dilated else 1
        h = conv1x1(out, raw["w1"][i], raw["b1"][i])
        h = gn(prelu(h, raw["alphas"][2 * i]), raw["g1w"][i], raw["g1b"][i])
        h = dconv(h, raw["dw"][i], raw["db"][i], d)
        h = gn(prelu(h, raw["alphas"][2 * i + 1]), raw["g2w"][i], raw["g2b"][i])
        skip = skip + conv1x1(h, raw["sw"][i], raw["sb"][i])
        if i < nb - 1:
            out = out + conv1x1(h, raw["rw"][i], raw["rb"][i])
    return conv1x1(prelu(skip, raw["alphas"][2 * nb]), raw["out_w"], raw["out_b"])


# ------------------------------------------------------------------------ main
if __name__ == "__main__":
    # Shrunk TCN config consistent with TasNet's
    # TCN(enc_dim, enc_dim*num_spk//2, feature_dim, 4*feature_dim, layer, stack, 3).
    B = 2
    input_dim, output_dim, BN_dim, hidden_dim = 16, 16, 16, 32
    layer, stack, ksize, T = 3, 2, 3, 128

    key = jax.random.PRNGKey(0)
    kx, kp = jax.random.split(key)
    x = jax.random.normal(kx, (B, input_dim, T), jnp.float32)
    raw = init_raw_tcn_params(kp, input_dim, output_dim, BN_dim, hidden_dim,
                              layer, stack, ksize)
    params = fold_tcn_params(raw)

    y = tcn_forward(x, params, layer=layer, stack=stack, ksize=ksize,
                    dilated=True)
    jax.block_until_ready(y)
    assert y.shape == (B, output_dim, T) and y.dtype == jnp.float32
    assert bool(jnp.all(jnp.isfinite(y)))
    y_ref = tcn_reference(x, raw, layer=layer, stack=stack, ksize=ksize,
                          dilated=True)
    err = float(jnp.max(jnp.abs(y - y_ref)) / (jnp.max(jnp.abs(y_ref)) + 1e-6))
    assert err < 5e-2, f"mismatch vs reference: rel err {err}"

    # Also exercise the non-multiple-of-128 time path (zero-pad + masked stats).
    T2 = 100
    x2 = jax.random.normal(jax.random.fold_in(kx, 1), (B, input_dim, T2),
                           jnp.float32)
    y2 = tcn_forward(x2, params, layer=layer, stack=stack, ksize=ksize,
                     dilated=True)
    jax.block_until_ready(y2)
    assert y2.shape == (B, output_dim, T2)
    assert bool(jnp.all(jnp.isfinite(y2)))
    y2_ref = tcn_reference(x2, raw, layer=layer, stack=stack, ksize=ksize,
                           dilated=True)
    err2 = float(jnp.max(jnp.abs(y2 - y2_ref)) / (jnp.max(jnp.abs(y2_ref)) + 1e-6))
    assert err2 < 5e-2, f"mismatch vs reference (padded T): rel err {err2}"

    print("KERNEL_OK")
</pallas_src>

<mosaic_0001>
module attributes {stable_mosaic.version = 11 : i64} {
  func.func @_tcn_kernel(%arg0: i32, %arg1: i32, %arg2: memref<1x16x128xf32, #tpu.memory_space<vmem>>, %arg3: memref<13xf32, #tpu.memory_space<smem>>, %arg4: memref<16x16xbf16, #tpu.memory_space<vmem>>, %arg5: memref<16x1xf32, #tpu.memory_space<vmem>>, %arg6: memref<16x16xbf16, #tpu.memory_space<vmem>>, %arg7: memref<16x1xf32, #tpu.memory_space<vmem>>, %arg8: memref<1x32x16xbf16, #tpu.memory_space<vmem>>, %arg9: memref<1x32x1xf32, #tpu.memory_space<vmem>>, %arg10: memref<1x32x1xf32, #tpu.memory_space<vmem>>, %arg11: memref<1x32x3xf32, #tpu.memory_space<vmem>>, %arg12: memref<1x32x1xf32, #tpu.memory_space<vmem>>, %arg13: memref<1x32x32xbf16, #tpu.memory_space<vmem>>, %arg14: memref<1x32x1xf32, #tpu.memory_space<vmem>>, %arg15: memref<1x16x128xf32, #tpu.memory_space<vmem>>, %arg16: memref<16x128xf32, #tpu.memory_space<vmem>>, %arg17: memref<16x128xf32, #tpu.memory_space<vmem>>) attributes {dimension_semantics = [#tpu.dimension_semantics<parallel>, #tpu.dimension_semantics<arbitrary>], iteration_bounds = array<i64: 2, 6>, scalar_prefetch = 0 : i64, scratch_operands = 2 : i64, tpu.core_type = #tpu.core_type<tc>, window_params = [{transform_indices = @transform_0, window_bounds = array<i64: 1, 16, 128>}, {transform_indices = @transform_1, window_bounds = array<i64: 13>}, {pipeline_mode = #tpu.pipeline_mode<synchronous>, transform_indices = @transform_2, window_bounds = array<i64: 16, 16>}, {pipeline_mode = #tpu.pipeline_mode<synchronous>, transform_indices = @transform_3, window_bounds = array<i64: 16, 1>}, {pipeline_mode = #tpu.pipeline_mode<synchronous>, transform_indices = @transform_4, window_bounds = array<i64: 16, 16>}, {pipeline_mode = #tpu.pipeline_mode<synchronous>, transform_indices = @transform_5, window_bounds = array<i64: 16, 1>}, {transform_indices = @transform_6, window_bounds = array<i64: 1, 32, 16>}, {transform_indices = @transform_7, window_bounds = array<i64: 1, 32, 1>}, {transform_indices = @transform_8, window_bounds = array<i64: 1, 32, 1>}, {transform_indices = @transform_9, window_bounds = array<i64: 1, 32, 3>}, {transform_indices = @transform_10, window_bounds = array<i64: 1, 32, 1>}, {transform_indices = @transform_11, window_bounds = array<i64: 1, 32, 32>}, {transform_indices = @transform_12, window_bounds = array<i64: 1, 32, 1>}, {transform_indices = @transform_13, window_bounds = array<i64: 1, 16, 128>}]} {
    %0 = tpu.iota {dimensions = array<i32: 1>} : vector<1x128xi32>
    %c0_i32 = arith.constant 0 : i32
    %1 = arith.cmpi eq, %arg1, %c0_i32 : i32
    %2 = arith.extui %1 : i1 to i32
    %c0_i32_0 = arith.constant 0 : i32
    %3 = arith.cmpi ne, %2, %c0_i32_0 : i32
    scf.if %3 {
      %c0_54 = arith.constant 0 : index
      %c0_55 = arith.constant 0 : index
      %c0_56 = arith.constant 0 : index
      %116 = vector.load %arg2[%c0_54, %c0_55, %c0_56] : memref<1x16x128xf32, #tpu.memory_space<vmem>>, vector<1x16x128xf32>
      %117 = vector.shape_cast %116 : vector<1x16x128xf32> to vector<16x128xf32>
      %118 = vector.shape_cast %117 : vector<16x128xf32> to vector<1x16x128xf32>
      %cst_57 = arith.constant dense<0.000000e+00> : vector<1xf32>
      %119 = vector.multi_reduction <add>, %118, %cst_57 [1, 2] : vector<1x16x128xf32> to vector<1xf32>
      %120 = vector.shape_cast %119 : vector<1xf32> to vector<1x1x1xf32>
      %121 = vector.extract %120[0, 0, 0] : f32 from vector<1x1x1xf32>
      %122 = arith.mulf %117, %117 : vector<16x128xf32>
      %123 = vector.shape_cast %122 : vector<16x128xf32> to vector<1x16x128xf32>
      %cst_58 = arith.constant dense<0.000000e+00> : vector<1xf32>
      %124 = vector.multi_reduction <add>, %123, %cst_58 [1, 2] : vector<1x16x128xf32> to vector<1xf32>
      %125 = vector.shape_cast %124 : vector<1xf32> to vector<1x1x1xf32>
      %126 = vector.extract %125[0, 0, 0] : f32 from vector<1x1x1xf32>
      %cst_59 = arith.constant 4.8828125E-4 : f32
      %127 = arith.mulf %121, %cst_59 : f32
      %cst_60 = arith.constant 4.8828125E-4 : f32
      %128 = arith.mulf %126, %cst_60 : f32
      %129 = arith.mulf %127, %127 : f32
      %130 = arith.subf %128, %129 : f32
      %cst_61 = arith.constant 0.000000e+00 : f32
      %131 = arith.maximumf %130, %cst_61 : f32
      %132 = vector.broadcast %127 : f32 to vector<16x128xf32>
      %133 = arith.subf %117, %132 : vector<16x128xf32>
      %cst_62 = arith.constant 9.99999993E-9 : f32
      %134 = arith.addf %131, %cst_62 : f32
      %135 = math.rsqrt %134 : f32
      %136 = vector.broadcast %135 : f32 to vector<16x128xf32>
      %137 = arith.mulf %133, %136 : vector<16x128xf32>
      %c0_63 = arith.constant 0 : index
      %c0_64 = arith.constant 0 : index
      %138 = vector.load %arg4[%c0_63, %c0_64] : memref<16x16xbf16, #tpu.memory_space<vmem>>, vector<16x16xbf16>
      %139 = arith.truncf %137 : vector<16x128xf32> to vector<16x128xbf16>
      %cst_65 = arith.constant dense<0.000000e+00> : vector<16x128xf32>
      %140 = tpu.matmul %138, %139, %cst_65 {dimension_numbers = #tpu.dot_dimension_numbers<[1], [0], [0], [1], [0, 0, 1, 1], [], []>} : vector<16x16xbf16>, vector<16x128xbf16>, vector<16x128xf32> -> vector<16x128xf32>
      %c0_66 = arith.constant 0 : index
      %c0_67 = arith.constant 0 : index
      %141 = vector.load %arg5[%c0_66, %c0_67] : memref<16x1xf32, #tpu.memory_space<vmem>>, vector<16x1xf32>
      %142 = vector.broadcast %141 : vector<16x1xf32> to vector<16x128xf32>
      %143 = arith.addf %140, %142 : vector<16x128xf32>
      %c0_68 = arith.constant 0 : index
      %c0_69 = arith.constant 0 : index
      %144 = vector.load %arg16[%c0_68, %c0_69] : memref<16x128xf32, #tpu.memory_space<vmem>>, vector<16x128xf32>
      tpu.vector_store %arg16[%c0_68, %c0_69], %143 {strides = array<i32>} : memref<16x128xf32, #tpu.memory_space<vmem>>, vector<16x128xf32>,
      %cst_70 = arith.constant 0.000000e+00 : f32
      %145 = vector.broadcast %cst_70 : f32 to vector<16x128xf32>
      %c0_71 = arith.constant 0 : index
      %c0_72 = arith.constant 0 : index
      %146 = vector.load %arg17[%c0_71, %c0_72] : memref<16x128xf32, #tpu.memory_space<vmem>>, vector<16x128xf32>
      tpu.vector_store %arg17[%c0_71, %c0_72], %145 {strides = array<i32>} : memref<16x128xf32, #tpu.memory_space<vmem>>, vector<16x128xf32>,
    } else {
    }
    %c2_i32 = arith.constant 2 : i32
    %4 = arith.muli %c2_i32, %arg1 : i32
    %5 = arith.index_cast %4 : i32 to index
    %6 = memref.load %arg3[%5] : memref<13xf32, #tpu.memory_space<smem>>
    %c2_i32_1 = arith.constant 2 : i32
    %7 = arith.muli %c2_i32_1, %arg1 : i32
    %c1_i32 = arith.constant 1 : i32
    %8 = arith.addi %7, %c1_i32 : i32
    %9 = arith.index_cast %8 : i32 to index
    %10 = memref.load %arg3[%9] : memref<13xf32, #tpu.memory_space<smem>>
    %c0 = arith.constant 0 : index
    %c0_2 = arith.constant 0 : index
    %11 = vector.load %arg16[%c0, %c0_2] : memref<16x128xf32, #tpu.memory_space<vmem>>, vector<16x128xf32>
    %c0_3 = arith.constant 0 : index
    %c0_4 = arith.constant 0 : index
    %c0_5 = arith.constant 0 : index
    %12 = vector.load %arg8[%c0_3, %c0_4, %c0_5] : memref<1x32x16xbf16, #tpu.memory_space<vmem>>, vector<1x32x16xbf16>
    %13 = vector.shape_cast %12 : vector<1x32x16xbf16> to vector<32x16xbf16>
    %14 = arith.truncf %11 : vector<16x128xf32> to vector<16x128xbf16>
    %cst = arith.constant dense<0.000000e+00> : vector<32x128xf32>
    %15 = tpu.matmul %13, %14, %cst {dimension_numbers = #tpu.dot_dimension_numbers<[1], [0], [0], [1], [0, 0, 1, 1], [], []>} : vector<32x16xbf16>, vector<16x128xbf16>, vector<32x128xf32> -> vector<32x128xf32>
    %c0_6 = arith.constant 0 : index
    %c0_7 = arith.constant 0 : index
    %c0_8 = arith.constant 0 : index
    %16 = vector.load %arg9[%c0_6, %c0_7, %c0_8] : memref<1x32x1xf32, #tpu.memory_space<vmem>>, vector<1x32x1xf32>
    %17 = vector.shape_cast %16 : vector<1x32x1xf32> to vector<32x1xf32>
    %18 = vector.broadcast %17 : vector<32x1xf32> to vector<32x128xf32>
    %19 = arith.addf %15, %18 : vector<32x128xf32>
    %cst_9 = arith.constant 0.000000e+00 : f32
    %20 = vector.broadcast %cst_9 : f32 to vector<32x128xf32>
    %21 = arith.cmpf ogt, %19, %20 : vector<32x128xf32>
    %22 = vector.broadcast %6 : f32 to vector<32x128xf32>
    %23 = arith.mulf %22, %19 : vector<32x128xf32>
    %24 = arith.select %21, %19, %23 : vector<32x128xi1>, vector<32x128xf32>
    %c0_10 = arith.constant 0 : index
    %c0_11 = arith.constant 0 : index
    %c0_12 = arith.constant 0 : index
    %25 = vector.load %arg10[%c0_10, %c0_11, %c0_12] : memref<1x32x1xf32, #tpu.memory_space<vmem>>, vector<1x32x1xf32>
    %26 = vector.shape_cast %25 : vector<1x32x1xf32> to vector<32x1xf32>
    %27 = vector.shape_cast %24 : vector<32x128xf32> to vector<1x32x128xf32>
    %cst_13 = arith.constant dense<0.000000e+00> : vector<1xf32>
    %28 = vector.multi_reduction <add>, %27, %cst_13 [1, 2] : vector<1x32x128xf32> to vector<1xf32>
    %29 = vector.shape_cast %28 : vector<1xf32> to vector<1x1x1xf32>
    %30 = vector.extract %29[0, 0, 0] : f32 from vector<1x1x1xf32>
    %31 = arith.mulf %24, %24 : vector<32x128xf32>
    %32 = vector.shape_cast %31 : vector<32x128xf32> to vector<1x32x128xf32>
    %cst_14 = arith.constant dense<0.000000e+00> : vector<1xf32>
    %33 = vector.multi_reduction <add>, %32, %cst_14 [1, 2] : vector<1x32x128xf32> to vector<1xf32>
    %34 = vector.shape_cast %33 : vector<1xf32> to vector<1x1x1xf32>
    %35 = vector.extract %34[0, 0, 0] : f32 from vector<1x1x1xf32>
    %cst_15 = arith.constant 2.44140625E-4 : f32
    %36 = arith.mulf %30, %cst_15 : f32
    %cst_16 = arith.constant 2.44140625E-4 : f32
    %37 = arith.mulf %35, %cst_16 : f32
    %38 = arith.mulf %36, %36 : f32
    %39 = arith.subf %37, %38 : f32
    %cst_17 = arith.constant 0.000000e+00 : f32
    %40 = arith.maximumf %39, %cst_17 : f32
    %41 = vector.broadcast %36 : f32 to vector<32x128xf32>
    %42 = arith.subf %24, %41 : vector<32x128xf32>
    %cst_18 = arith.constant 9.99999993E-9 : f32
    %43 = arith.addf %40, %cst_18 : f32
    %44 = math.rsqrt %43 : f32
    %45 = vector.broadcast %44 : f32 to vector<32x128xf32>
    %46 = arith.mulf %42, %45 : vector<32x128xf32>
    %47 = vector.broadcast %26 : vector<32x1xf32> to vector<32x128xf32>
    %48 = arith.addf %46, %47 : vector<32x128xf32>
    %c0_19 = arith.constant 0 : index
    %c0_20 = arith.constant 0 : index
    %c0_21 = arith.constant 0 : index
    %49 = vector.load %arg11[%c0_19, %c0_20, %c0_21] : memref<1x32x3xf32, #tpu.memory_space<vmem>>, vector<1x32x3xf32>
    %50 = vector.shape_cast %49 : vector<1x32x3xf32> to vector<32x3xf32>
    %51 = vector.extract_strided_slice %50 {offsets = [0, 1], sizes = [32, 1], strides = [1, 1]} : vector<32x3xf32> to vector<32x1xf32>
    %52 = vector.broadcast %51 : vector<32x1xf32> to vector<32x128xf32>
    %53 = arith.mulf %48, %52 : vector<32x128xf32>
    %c3_i32 = arith.constant 3 : i32
    %c0_i32_22 = arith.constant 0 : i32
    %54 = arith.cmpi eq, %c3_i32, %c0_i32_22 : i32
    %c1_i32_23 = arith.constant 1 : i32
    %55 = arith.select %54, %c1_i32_23, %c3_i32 : i32
    %56 = arith.remsi %arg1, %55 : i32
    %c0_i32_24 = arith.constant 0 : i32
    %57 = arith.cmpi ne, %56, %c0_i32_24 : i32
    %c0_i32_25 = arith.constant 0 : i32
    %58 = arith.cmpi slt, %56, %c0_i32_25 : i32
    %c0_i32_26 = arith.constant 0 : i32
    %59 = arith.cmpi slt, %55, %c0_i32_26 : i32
    %60 = arith.xori %58, %59 : i1
    %61 = arith.andi %60, %57 : i1
    %62 = arith.addi %56, %55 : i32
    %63 = arith.select %61, %62, %56 : i32
    %c0_i32_27 = arith.constant 0 : i32
    %c2_i32_28 = arith.constant 2 : i32
    %64 = arith.maxsi %63, %c0_i32_27 : i32
    %65 = arith.minsi %64, %c2_i32_28 : i32
    %c0_i32_29 = arith.constant 0 : i32
    %66 = arith.cmpi ne, %65, %c0_i32_29 : i32
    %67 = scf.if %66 -> (vector<32x128xf32>) {
      %c1_i32_54 = arith.constant 1 : i32
      %116 = arith.subi %65, %c1_i32_54 : i32
      %c0_i32_55 = arith.constant 0 : i32
      %117 = arith.cmpi ne, %116, %c0_i32_55 : i32
      %118 = scf.if %117 -> (vector<32x128xf32>) {
        %c4_i32 = arith.constant 4 : i32
        %119 = tpu.dynamic_rotate %48 by %c4_i32 dim 1 : vector<32x128xf32>, i32 -> vector<32x128xf32>
        %c4_i32_56 = arith.constant 4 : i32
        %120 = vector.broadcast %c4_i32_56 : i32 to vector<1x128xi32>
        %121 = arith.cmpi sge, %0, %120 : vector<1x128xi32>
        %cst_57 = arith.constant 0.000000e+00 : f32
        %122 = vector.shape_cast %121 : vector<1x128xi1> to vector<1x128xi1>
        %123 = vector.broadcast %122 : vector<1x128xi1> to vector<32x128xi1>
        %124 = vector.broadcast %cst_57 : f32 to vector<32x128xf32>
        %125 = arith.select %123, %119, %124 : vector<32x128xi1>, vector<32x128xf32>
        %126 = vector.extract_strided_slice %50 {offsets = [0, 0], sizes = [32, 1], strides = [1, 1]} : vector<32x3xf32> to vector<32x1xf32>
        %127 = vector.broadcast %126 : vector<32x1xf32> to vector<32x128xf32>
        %128 = arith.mulf %125, %127 : vector<32x128xf32>
        %c124_i32 = arith.constant 124 : i32
        %129 = tpu.dynamic_rotate %48 by %c124_i32 dim 1 : vector<32x128xf32>, i32 -> vector<32x128xf32>
        %c124_i32_58 = arith.constant 124 : i32
        %130 = vector.broadcast %c124_i32_58 : i32 to vector<1x128xi32>
        %131 = arith.cmpi slt, %0, %130 : vector<1x128xi32>
        %cst_59 = arith.constant 0.000000e+00 : f32
        %132 = vector.shape_cast %131 : vector<1x128xi1> to vector<1x128xi1>
        %133 = vector.broadcast %132 : vector<1x128xi1> to vector<32x128xi1>
        %134 = vector.broadcast %cst_59 : f32 to vector<32x128xf32>
        %135 = arith.select %133, %129, %134 : vector<32x128xi1>, vector<32x128xf32>
        %136 = vector.extract_strided_slice %50 {offsets = [0, 2], sizes = [32, 1], strides = [1, 1]} : vector<32x3xf32> to vector<32x1xf32>
        %137 = vector.broadcast %136 : vector<32x1xf32> to vector<32x128xf32>
        %138 = arith.mulf %135, %137 : vector<32x128xf32>
        %139 = arith.addf %128, %138 : vector<32x128xf32>
        scf.yield %139 : vector<32x128xf32>
      } else {
        %c2_i32_56 = arith.constant 2 : i32
        %119 = tpu.dynamic_rotate %48 by %c2_i32_56 dim 1 : vector<32x128xf32>, i32 -> vector<32x128xf32>
        %c2_i32_57 = arith.constant 2 : i32
        %120 = vector.broadcast %c2_i32_57 : i32 to vector<1x128xi32>
        %121 = arith.cmpi sge, %0, %120 : vector<1x128xi32>
        %cst_58 = arith.constant 0.000000e+00 : f32
        %122 = vector.shape_cast %121 : vector<1x128xi1> to vector<1x128xi1>
        %123 = vector.broadcast %122 : vector<1x128xi1> to vector<32x128xi1>
        %124 = vector.broadcast %cst_58 : f32 to vector<32x128xf32>
        %125 = arith.select %123, %119, %124 : vector<32x128xi1>, vector<32x128xf32>
        %126 = vector.extract_strided_slice %50 {offsets = [0, 0], sizes = [32, 1], strides = [1, 1]} : vector<32x3xf32> to vector<32x1xf32>
        %127 = vector.broadcast %126 : vector<32x1xf32> to vector<32x128xf32>
        %128 = arith.mulf %125, %127 : vector<32x128xf32>
        %c126_i32 = arith.constant 126 : i32
        %129 = tpu.dynamic_rotate %48 by %c126_i32 dim 1 : vector<32x128xf32>, i32 -> vector<32x128xf32>
        %c126_i32_59 = arith.constant 126 : i32
        %130 = vector.broadcast %c126_i32_59 : i32 to vector<1x128xi32>
        %131 = arith.cmpi slt, %0, %130 : vector<1x128xi32>
        %cst_60 = arith.constant 0.000000e+00 : f32
        %132 = vector.shape_cast %131 : vector<1x128xi1> to vector<1x128xi1>
        %133 = vector.broadcast %132 : vector<1x128xi1> to vector<32x128xi1>
        %134 = vector.broadcast %cst_60 : f32 to vector<32x128xf32>
        %135 = arith.select %133, %129, %134 : vector<32x128xi1>, vector<32x128xf32>
        %136 = vector.extract_strided_slice %50 {offsets = [0, 2], sizes = [32, 1], strides = [1, 1]} : vector<32x3xf32> to vector<32x1xf32>
        %137 = vector.broadcast %136 : vector<32x1xf32> to vector<32x128xf32>
        %138 = arith.mulf %135, %137 : vector<32x128xf32>
        %139 = arith.addf %128, %138 : vector<32x128xf32>
        scf.yield %139 : vector<32x128xf32>
      }
      scf.yield %118 : vector<32x128xf32>
    } else {
      %c1_i32_54 = arith.constant 1 : i32
      %116 = tpu.dynamic_rotate %48 by %c1_i32_54 dim 1 : vector<32x128xf32>, i32 -> vector<32x128xf32>
      %c1_i32_55 = arith.constant 1 : i32
      %117 = vector.broadcast %c1_i32_55 : i32 to vector<1x128xi32>
      %118 = arith.cmpi sge, %0, %117 : vector<1x128xi32>
      %cst_56 = arith.constant 0.000000e+00 : f32
      %119 = vector.shape_cast %118 : vector<1x128xi1> to vector<1x128xi1>
      %120 = vector.broadcast %119 : vector<1x128xi1> to vector<32x128xi1>
      %121 = vector.broadcast %cst_56 : f32 to vector<32x128xf32>
      %122 = arith.select %120, %116, %121 : vector<32x128xi1>, vector<32x128xf32>
      %123 = vector.extract_strided_slice %50 {offsets = [0, 0], sizes = [32, 1], strides = [1, 1]} : vector<32x3xf32> to vector<32x1xf32>
      %124 = vector.broadcast %123 : vector<32x1xf32> to vector<32x128xf32>
      %125 = arith.mulf %122, %124 : vector<32x128xf32>
      %c127_i32 = arith.constant 127 : i32
      %126 = tpu.dynamic_rotate %48 by %c127_i32 dim 1 : vector<32x128xf32>, i32 -> vector<32x128xf32>
      %c127_i32_57 = arith.constant 127 : i32
      %127 = vector.broadcast %c127_i32_57 : i32 to vector<1x128xi32>
      %128 = arith.cmpi slt, %0, %127 : vector<1x128xi32>
      %cst_58 = arith.constant 0.000000e+00 : f32
      %129 = vector.shape_cast %128 : vector<1x128xi1> to vector<1x128xi1>
      %130 = vector.broadcast %129 : vector<1x128xi1> to vector<32x128xi1>
      %131 = vector.broadcast %cst_58 : f32 to vector<32x128xf32>
      %132 = arith.select %130, %126, %131 : vector<32x128xi1>, vector<32x128xf32>
      %133 = vector.extract_strided_slice %50 {offsets = [0, 2], sizes = [32, 1], strides = [1, 1]} : vector<32x3xf32> to vector<32x1xf32>
      %134 = vector.broadcast %133 : vector<32x1xf32> to vector<32x128xf32>
      %135 = arith.mulf %132, %134 : vector<32x128xf32>
      %136 = arith.addf %125, %135 : vector<32x128xf32>
      scf.yield %136 : vector<32x128xf32>
    }
    %68 = arith.addf %53, %67 : vector<32x128xf32>
    %c0_30 = arith.constant 0 : index
    %c0_31 = arith.constant 0 : index
    %c0_32 = arith.constant 0 : index
    %69 = vector.load %arg12[%c0_30, %c0_31, %c0_32] : memref<1x32x1xf32, #tpu.memory_space<vmem>>, vector<1x32x1xf32>
    %70 = vector.shape_cast %69 : vector<1x32x1xf32> to vector<32x1xf32>
    %71 = vector.broadcast %70 : vector<32x1xf32> to vector<32x128xf32>
    %72 = arith.addf %68, %71 : vector<32x128xf32>
    %cst_33 = arith.constant 0.000000e+00 : f32
    %73 = vector.broadcast %cst_33 : f32 to vector<32x128xf32>
    %74 = arith.cmpf ogt, %72, %73 : vector<32x128xf32>
    %75 = vector.broadcast %10 : f32 to vector<32x128xf32>
    %76 = arith.mulf %75, %72 : vector<32x128xf32>
    %77 = arith.select %74, %72, %76 : vector<32x128xi1>, vector<32x128xf32>
    %78 = vector.shape_cast %77 : vector<32x128xf32> to vector<1x32x128xf32>
    %cst_34 = arith.constant dense<0.000000e+00> : vector<1xf32>
    %79 = vector.multi_reduction <add>, %78, %cst_34 [1, 2] : vector<1x32x128xf32> to vector<1xf32>
    %80 = vector.shape_cast %79 : vector<1xf32> to vector<1x1x1xf32>
    %81 = vector.extract %80[0, 0, 0] : f32 from vector<1x1x1xf32>
    %82 = arith.mulf %77, %77 : vector<32x128xf32>
    %83 = vector.shape_cast %82 : vector<32x128xf32> to vector<1x32x128xf32>
    %cst_35 = arith.constant dense<0.000000e+00> : vector<1xf32>
    %84 = vector.multi_reduction <add>, %83, %cst_35 [1, 2] : vector<1x32x128xf32> to vector<1xf32>
    %85 = vector.shape_cast %84 : vector<1xf32> to vector<1x1x1xf32>
    %86 = vector.extract %85[0, 0, 0] : f32 from vector<1x1x1xf32>
    %cst_36 = arith.constant 2.44140625E-4 : f32
    %87 = arith.mulf %81, %cst_36 : f32
    %cst_37 = arith.constant 2.44140625E-4 : f32
    %88 = arith.mulf %86, %cst_37 : f32
    %89 = arith.mulf %87, %87 : f32
    %90 = arith.subf %88, %89 : f32
    %cst_38 = arith.constant 0.000000e+00 : f32
    %91 = arith.maximumf %90, %cst_38 : f32
    %92 = vector.broadcast %87 : f32 to vector<32x128xf32>
    %93 = arith.subf %77, %92 : vector<32x128xf32>
    %cst_39 = arith.constant 9.99999993E-9 : f32
    %94 = arith.addf %91, %cst_39 : f32
    %95 = math.rsqrt %94 : f32
    %96 = vector.broadcast %95 : f32 to vector<32x128xf32>
    %97 = arith.mulf %93, %96 : vector<32x128xf32>
    %c0_40 = arith.constant 0 : index
    %c0_41 = arith.constant 0 : index
    %c0_42 = arith.constant 0 : index
    %98 = vector.load %arg13[%c0_40, %c0_41, %c0_42] : memref<1x32x32xbf16, #tpu.memory_space<vmem>>, vector<1x32x32xbf16>
    %99 = vector.shape_cast %98 : vector<1x32x32xbf16> to vector<32x32xbf16>
    %100 = arith.truncf %97 : vector<32x128xf32> to vector<32x128xbf16>
    %cst_43 = arith.constant dense<0.000000e+00> : vector<32x128xf32>
    %101 = tpu.matmul %99, %100, %cst_43 {dimension_numbers = #tpu.dot_dimension_numbers<[1], [0], [0], [1], [0, 0, 1, 1], [], []>} : vector<32x32xbf16>, vector<32x128xbf16>, vector<32x128xf32> -> vector<32x128xf32>
    %c0_44 = arith.constant 0 : index
    %c0_45 = arith.constant 0 : index
    %c0_46 = arith.constant 0 : index
    %102 = vector.load %arg14[%c0_44, %c0_45, %c0_46] : memref<1x32x1xf32, #tpu.memory_space<vmem>>, vector<1x32x1xf32>
    %103 = vector.shape_cast %102 : vector<1x32x1xf32> to vector<32x1xf32>
    %104 = vector.broadcast %103 : vector<32x1xf32> to vector<32x128xf32>
    %105 = arith.addf %101, %104 : vector<32x128xf32>
    %c0_47 = arith.constant 0 : index
    %c0_48 = arith.constant 0 : index
    %106 = vector.load %arg17[%c0_47, %c0_48] : memref<16x128xf32, #tpu.memory_space<vmem>>, vector<16x128xf32>
    %107 = vector.extract_strided_slice %105 {offsets = [16, 0], sizes = [16, 128], strides = [1, 1]} : vector<32x128xf32> to vector<16x128xf32>
    %108 = arith.addf %106, %107 : vector<16x128xf32>
    %c0_49 = arith.constant 0 : index
    %c0_50 = arith.constant 0 : index
    %109 = vector.load %arg17[%c0_49, %c0_50] : memref<16x128xf32, #tpu.memory_space<vmem>>, vector<16x128xf32>
    tpu.vector_store %arg17[%c0_49, %c0_50], %108 {strides = array<i32>} : memref<16x128xf32, #tpu.memory_space<vmem>>, vector<16x128xf32>,
    %c5_i32 = arith.constant 5 : i32
    %110 = arith.cmpi slt, %arg1, %c5_i32 : i32
    %111 = arith.extui %110 : i1 to i32
    %c0_i32_51 = arith.constant 0 : i32
    %112 = arith.cmpi ne, %111, %c0_i32_51 : i32
    scf.if %112 {
      %116 = vector.extract_strided_slice %105 {offsets = [0, 0], sizes = [16, 128], strides = [1, 1]} : vector<32x128xf32> to vector<16x128xf32>
      %117 = arith.addf %11, %116 : vector<16x128xf32>
      %c0_54 = arith.constant 0 : index
      %c0_55 = arith.constant 0 : index
      %118 = vector.load %arg16[%c0_54, %c0_55] : memref<16x128xf32, #tpu.memory_space<vmem>>, vector<16x128xf32>
      tpu.vector_store %arg16[%c0_54, %c0_55], %117 {strides = array<i32>} : memref<16x128xf32, #tpu.memory_space<vmem>>, vector<16x128xf32>,
    } else {
    }
    %c5_i32_52 = arith.constant 5 : i32
    %113 = arith.cmpi eq, %arg1, %c5_i32_52 : i32
    %114 = arith.extui %113 : i1 to i32
    %c0_i32_53 = arith.constant 0 : i32
    %115 = arith.cmpi ne, %114, %c0_i32_53 : i32
    scf.if %115 {
      %c0_54 = arith.constant 0 : index
      %c0_55 = arith.constant 0 : index
      %116 = vector.load %arg17[%c0_54, %c0_55] : memref<16x128xf32, #tpu.memory_space<vmem>>, vector<16x128xf32>
      %c12 = arith.constant 12 : index
      %117 = memref.load %arg3[%c12] : memref<13xf32, #tpu.memory_space<smem>>
      %cst_56 = arith.constant 0.000000e+00 : f32
      %118 = vector.broadcast %cst_56 : f32 to vector<16x128xf32>
      %119 = arith.cmpf ogt, %116, %118 : vector<16x128xf32>
      %120 = vector.broadcast %117 : f32 to vector<16x128xf32>
      %121 = arith.mulf %120, %116 : vector<16x128xf32>
      %122 = arith.select %119, %116, %121 : vector<16x128xi1>, vector<16x128xf32>
      %c0_57 = arith.constant 0 : index
      %c0_58 = arith.constant 0 : index
      %123 = vector.load %arg6[%c0_57, %c0_58] : memref<16x16xbf16, #tpu.memory_space<vmem>>, vector<16x16xbf16>
      %124 = arith.truncf %122 : vector<16x128xf32> to vector<16x128xbf16>
      %cst_59 = arith.constant dense<0.000000e+00> : vector<16x128xf32>
      %125 = tpu.matmul %123, %124, %cst_59 {dimension_numbers = #tpu.dot_dimension_numbers<[1], [0], [0], [1], [0, 0, 1, 1], [], []>} : vector<16x16xbf16>, vector<16x128xbf16>, vector<16x128xf32> -> vector<16x128xf32>
      %c0_60 = arith.constant 0 : index
      %c0_61 = arith.constant 0 : index
      %126 = vector.load %arg7[%c0_60, %c0_61] : memref<16x1xf32, #tpu.memory_space<vmem>>, vector<16x1xf32>
      %127 = vector.broadcast %126 : vector<16x1xf32> to vector<16x128xf32>
      %128 = arith.addf %125, %127 : vector<16x128xf32>
      %c0_62 = arith.constant 0 : index
      %c0_63 = arith.constant 0 : index
      %c0_64 = arith.constant 0 : index
      %129 = vector.load %arg15[%c0_62, %c0_63, %c0_64] : memref<1x16x128xf32, #tpu.memory_space<vmem>>, vector<1x16x128xf32>
      %130 = vector.shape_cast %129 : vector<1x16x128xf32> to vector<16x128xf32>
      %131 = vector.shape_cast %128 : vector<16x128xf32> to vector<1x16x128xf32>
      tpu.vector_store %arg15[%c0_62, %c0_63, %c0_64], %131 {strides = array<i32>} : memref<1x16x128xf32, #tpu.memory_space<vmem>>, vector<1x16x128xf32>,
    } else {
    }
    return
  }
  func.func @transform_0(%arg0: i32, %arg1: i32) -> (i32, i32, i32) {
    %c0_i32 = arith.constant 0 : i32
    %c0_i32_0 = arith.constant 0 : i32
    %c0_i32_1 = arith.constant 0 : i32
    return %arg0, %c0_i32, %c0_i32_0 : i32, i32, i32
  }
  func.func @transform_1(%arg0: i32, %arg1: i32) -> i32 {
    %c0_i32 = arith.constant 0 : i32
    %c0_i32_0 = arith.constant 0 : i32
    return %c0_i32 : i32
  }
  func.func @transform_2(%arg0: i32, %arg1: i32) -> (i32, i32) {
    %c0_i32 = arith.constant 0 : i32
    %c0_i32_0 = arith.constant 0 : i32
    %c0_i32_1 = arith.constant 0 : i32
    return %c0_i32, %c0_i32_0 : i32, i32
  }
  func.func @transform_3(%arg0: i32, %arg1: i32) -> (i32, i32) {
    %c0_i32 = arith.constant 0 : i32
    %c0_i32_0 = arith.constant 0 : i32
    %c0_i32_1 = arith.constant 0 : i32
    return %c0_i32, %c0_i32_0 : i32, i32
  }
  func.func @transform_4(%arg0: i32, %arg1: i32) -> (i32, i32) {
    %c0_i32 = arith.constant 0 : i32
    %c0_i32_0 = arith.constant 0 : i32
    %c0_i32_1 = arith.constant 0 : i32
    return %c0_i32, %c0_i32_0 : i32, i32
  }
  func.func @transform_5(%arg0: i32, %arg1: i32) -> (i32, i32) {
    %c0_i32 = arith.constant 0 : i32
    %c0_i32_0 = arith.constant 0 : i32
    %c0_i32_1 = arith.constant 0 : i32
    return %c0_i32, %c0_i32_0 : i32, i32
  }
  func.func @transform_6(%arg0: i32, %arg1: i32) -> (i32, i32, i32) {
    %c0_i32 = arith.constant 0 : i32
    %c0_i32_0 = arith.constant 0 : i32
    %c0_i32_1 = arith.constant 0 : i32
    return %arg1, %c0_i32, %c0_i32_0 : i32, i32, i32
  }
  func.func @transform_7(%arg0: i32, %arg1: i32) -> (i32, i32, i32) {
    %c0_i32 = arith.constant 0 : i32
    %c0_i32_0 = arith.constant 0 : i32
    %c0_i32_1 = arith.constant 0 : i32
    return %arg1, %c0_i32, %c0_i32_0 : i32, i32, i32
  }
  func.func @transform_8(%arg0: i32, %arg1: i32) -> (i32, i32, i32) {
    %c0_i32 = arith.constant 0 : i32
    %c0_i32_0 = arith.constant 0 : i32
    %c0_i32_1 = arith.constant 0 : i32
    return %arg1, %c0_i32, %c0_i32_0 : i32, i32, i32
  }
  func.func @transform_9(%arg0: i32, %arg1: i32) -> (i32, i32, i32) {
    %c0_i32 = arith.constant 0 : i32
    %c0_i32_0 = arith.constant 0 : i32
    %c0_i32_1 = arith.constant 0 : i32
    return %arg1, %c0_i32, %c0_i32_0 : i32, i32, i32
  }
  func.func @transform_10(%arg0: i32, %arg1: i32) -> (i32, i32, i32) {
    %c0_i32 = arith.constant 0 : i32
    %c0_i32_0 = arith.constant 0 : i32
    %c0_i32_1 = arith.constant 0 : i32
    return %arg1, %c0_i32, %c0_i32_0 : i32, i32, i32
  }
  func.func @transform_11(%arg0: i32, %arg1: i32) -> (i32, i32, i32) {
    %c0_i32 = arith.constant 0 : i32
    %c0_i32_0 = arith.constant 0 : i32
    %c0_i32_1 = arith.constant 0 : i32
    return %arg1, %c0_i32, %c0_i32_0 : i32, i32, i32
  }
  func.func @transform_12(%arg0: i32, %arg1: i32) -> (i32, i32, i32) {
    %c0_i32 = arith.constant 0 : i32
    %c0_i32_0 = arith.constant 0 : i32
    %c0_i32_1 = arith.constant 0 : i32
    return %arg1, %c0_i32, %c0_i32_0 : i32, i32, i32
  }
  func.func @transform_13(%arg0: i32, %arg1: i32) -> (i32, i32, i32) {
    %c0_i32 = arith.constant 0 : i32
    %c0_i32_0 = arith.constant 0 : i32
    %c0_i32_1 = arith.constant 0 : i32
    return %arg0, %c0_i32, %c0_i32_0 : i32, i32, i32
  }
}

</mosaic_0001>

<llo_original>
// kernel: tpu_custom_call.1
$region0: #{tpu_custom_call.1}
  #allocation0 [shape = 'u32[]', space=smem, size = 0x4, offset = 0x4, fixed_abs, tag = 'smem constant byte address 0x4 - core index']
  #allocation1 [shape = 'u32[144,128]{1,0:T(1,128)}', space=vmem, size = 0x12000, scoped, tag = 'internal scratch']
  #allocation2 [shape = 'f32[16,128]{1,0:T(8,128)}', space=vmem, size = 0x2000, scoped, tag = 'scratch operand']
  #allocation3 [shape = 'f32[16,128]{1,0:T(8,128)}', space=vmem, size = 0x2000, scoped, tag = 'scratch operand']
  %s0 = inlined_call_operand.vmem [shape: f32[2,16,128], index: 0, kind: input, shape index: {}]
  %s1 = inlined_call_operand.vmem [shape: f32[13], index: 1, kind: input, shape index: {}]
  %s2 = inlined_call_operand.vmem [shape: bf16[16,16], index: 2, kind: input, shape index: {}]
  %s3 = inlined_call_operand.vmem [shape: f32[16,1], index: 3, kind: input, shape index: {}]
  %s4 = inlined_call_operand.vmem [shape: bf16[16,16], index: 4, kind: input, shape index: {}]
  %s5 = inlined_call_operand.vmem [shape: f32[16,1], index: 5, kind: input, shape index: {}]
  %s6 = inlined_call_operand.vmem [shape: bf16[6,32,16], index: 6, kind: input, shape index: {}]
  %s7 = inlined_call_operand.vmem [shape: f32[6,32,1], index: 7, kind: input, shape index: {}]
  %s8 = inlined_call_operand.vmem [shape: f32[6,32,1], index: 8, kind: input, shape index: {}]
  %s9 = inlined_call_operand.vmem [shape: f32[6,32,3], index: 9, kind: input, shape index: {}]
  %s10 = inlined_call_operand.vmem [shape: f32[6,32,1], index: 10, kind: input, shape index: {}]
  %s11 = inlined_call_operand.vmem [shape: bf16[6,32,32], index: 11, kind: input, shape index: {}]
  %s12 = inlined_call_operand.vmem [shape: f32[6,32,1], index: 12, kind: input, shape index: {}]
  %s13 = inlined_call_operand.hbm [shape: f32[2,16,128], index: 13, kind: output, shape index: {}]
  %s14 = sld [smem:[#allocation0]]
  $region117: #{tpu_custom_call.1} parent=0
    _
  %s16 = ssub.s32 1, %s14
  %s17 = scalar_select 0, %s16, %s14
  $region1: #{tpu_custom_call.1} parent=0
    #allocation4 [shape = 'u8[512]{0}', space=smem, size = 0x200, scoped, tag = 'input window, operand 1, single buffered']
    #allocation5 [shape = 's32[2]{0}', space=sflag, size = 0x8, scoped, tag = 'scoped memory for tpu_custom_call.1']
    #allocation6 [shape = 's32[2]{0}', space=sflag, size = 0x8, scoped, tag = 'scoped memory for tpu_custom_call.1']
    #allocation7 [shape = 'u8[16384]{0}', space=vmem, size = 0x4000, scoped, tag = 'output window, operand 0']
    %18 = vsyncpa [#allocation6], 0
    %19 = vsyncpa [#allocation5], 0
    %s20 = scalar_lea.sflag [#allocation5], 1
    %21 = vsyncpa %s20, 0
    loop: start=0, step=1, limit=14
    $region2: #{tpu_custom_call.1} parent=1 // loop_pre_header
      _
    $region3: #{tpu_custom_call.1} parent=1 // loop_header
      %s23 = sphi 0, %s27
      %p24 = scmp.ge.s32.totalorder %s23, 14
      %s30 = sphi 0, %s42
      %s31 = sphi 0, %s38
      %s32 = sphi 0, %s30
      %s33 = sphi 0, %s31
      %s34 = sphi 0, %s32
      %s35 = sphi 0, %s33
      %s45 = sphi 0, %s47
      %s48 = sphi 0, %s45
      %s49 = sphi 0, %s48
      %s65 = sphi 0, %s49
      %s69 = sphi 0, %s69
      %s71 = sphi 0, %s69
      %s72 = sphi 0, %s71
      %s86 = sphi 0, %s72
      %s90 = sphi 0, %s90
      %s92 = sphi 0, %s90
      %s93 = sphi 0, %s92
      %s107 = sphi 0, %s93
      %s111 = sphi 0, %s111
      %s113 = sphi 0, %s111
      %s114 = sphi 0, %s113
      %s128 = sphi 0, %s114
      %s132 = sphi 0, %s132
      %s134 = sphi 0, %s132
      %s135 = sphi 0, %s134
      %s149 = sphi 0, %s135
      %s153 = sphi 0, %s153
      %s155 = sphi 0, %s153
      %s156 = sphi 0, %s155
      %s170 = sphi 0, %s156
      %s176 = sphi 0, %s178
      %s179 = sphi 0, %s176
      %s180 = sphi 0, %s179
      %s196 = sphi 0, %s180
      %s202 = sphi 0, %s204
      %s205 = sphi 0, %s202
      %s206 = sphi 0, %s205
      %s222 = sphi 0, %s206
      %s228 = sphi 0, %s230
      %s231 = sphi 0, %s228
      %s232 = sphi 0, %s231
      %s248 = sphi 0, %s232
      %s254 = sphi 0, %s256
      %s257 = sphi 0, %s254
      %s258 = sphi 0, %s257
      %s274 = sphi 0, %s258
      %s280 = sphi 0, %s282
      %s283 = sphi 0, %s280
      %s284 = sphi 0, %s283
      %s300 = sphi 0, %s284
      %s306 = sphi 0, %s308
      %s309 = sphi 0, %s306
      %s310 = sphi 0, %s309
      %s326 = sphi 0, %s310
      %s332 = sphi 0, %s334
      %s335 = sphi 0, %s332
      %s336 = sphi 0, %s335
      %s352 = sphi 0, %s336
      %s358 = sphi 0, %s360
      %s361 = sphi 0, %s358
      %s362 = sphi 0, %s361
      %s378 = sphi 0, %s362
    $region4: #{tpu_custom_call.1} parent=1 // loop_header_branch
      %26 = sbr.rel (%p24) target = $region8
    $region5: #{tpu_custom_call.1} parent=1 // loop_body
      %s28 = ssub.s32 %s23, 1
      %s29 = ssub.s32 %s23, 2
      %s36 = sadd.s32 1, %s31
      %p37 = scmp.ge.s32.totalorder %s36, 6
      %s38 = scalar_select %p37, 0, %s36
      %s39 = sadd.s32 1, %s30
      %s40 = scalar_select %p37, %s39, %s30
      %p41 = scmp.ge.s32.totalorder %s40, 2
      %s42 = scalar_select %p41, 0, %s40
      %s43 = ssub.s32 %s30, %s42
      %p44 = scmp.eq.s32.totalorder %s43, 0
      %s46 = sadd.s32 %s45, 1
      %s47 = scalar_select %p44, %s45, %s46
      %p50 = pneg %p44
      %p51 = scmp.eq.s32.totalorder %s23, 11
      %p52 = por %p50, %p51
      %p53 = scmp.ne.s32.totalorder %s45, %s48
      %p54 = scmp.eq.s32.totalorder %s23, 0
      %p55 = por %p53, %p54
      %p56 = scmp.ne.s32.totalorder %s45, %s48
      %p57 = scmp.eq.s32.totalorder %s28, 11
      %p58 = por %p56, %p57
      %p59 = scmp.ne.s32.totalorder %s48, %s49
      %p60 = scmp.eq.s32.totalorder %s28, 0
      %p61 = por %p59, %p60
      %p62 = scmp.ne.s32.totalorder %s48, %s49
      %p63 = scmp.eq.s32.totalorder %s29, 11
      %p64 = por %p62, %p63
      %p66 = scmp.ne.s32.totalorder %s49, %s65
      %p67 = scmp.eq.s32.totalorder %s29, 0
      %p68 = por %p66, %p67
      %s70 = sadd.s32 %s69, 1
      %p73 = scmp.eq.s32.totalorder %s23, 11
      %p74 = scmp.ne.s32.totalorder %s69, %s71
      %p75 = scmp.eq.s32.totalorder %s23, 0
      %p76 = por %p74, %p75
      %p77 = scmp.ne.s32.totalorder %s69, %s71
      %p78 = scmp.eq.s32.totalorder %s28, 11
      %p79 = por %p77, %p78
      %p80 = scmp.ne.s32.totalorder %s71, %s72
      %p81 = scmp.eq.s32.totalorder %s28, 0
      %p82 = por %p80, %p81
      %p83 = scmp.ne.s32.totalorder %s71, %s72
      %p84 = scmp.eq.s32.totalorder %s29, 11
      %p85 = por %p83, %p84
      %p87 = scmp.ne.s32.totalorder %s72, %s86
      %p88 = scmp.eq.s32.totalorder %s29, 0
      %p89 = por %p87, %p88
      %s91 = sadd.s32 %s90, 1
      %p94 = scmp.eq.s32.totalorder %s23, 11
      %p95 = scmp.ne.s32.totalorder %s90, %s92
      %p96 = scmp.eq.s32.totalorder %s23, 0
      %p97 = por %p95, %p96
      %p98 = scmp.ne.s32.totalorder %s90, %s92
      %p99 = scmp.eq.s32.totalorder %s28, 11
      %p100 = por %p98, %p99
      %p101 = scmp.ne.s32.totalorder %s92, %s93
      %p102 = scmp.eq.s32.totalorder %s28, 0
      %p103 = por %p101, %p102
      %p104 = scmp.ne.s32.totalorder %s92, %s93
      %p105 = scmp.eq.s32.totalorder %s29, 11
      %p106 = por %p104, %p105
      %p108 = scmp.ne.s32.totalorder %s93, %s107
      %p109 = scmp.eq.s32.totalorder %s29, 0
      %p110 = por %p108, %p109
      %s112 = sadd.s32 %s111, 1
      %p115 = scmp.eq.s32.totalorder %s23, 11
      %p116 = scmp.ne.s32.totalorder %s111, %s113
      %p117 = scmp.eq.s32.totalorder %s23, 0
      %p118 = por %p116, %p117
      %p119 = scmp.ne.s32.totalorder %s111, %s113
      %p120 = scmp.eq.s32.totalorder %s28, 11
      %p121 = por %p119, %p120
      %p122 = scmp.ne.s32.totalorder %s113, %s114
      %p123 = scmp.eq.s32.totalorder %s28, 0
      %p124 = por %p122, %p123
      %p125 = scmp.ne.s32.totalorder %s113, %s114
      %p126 = scmp.eq.s32.totalorder %s29, 11
      %p127 = por %p125, %p126
      %p129 = scmp.ne.s32.totalorder %s114, %s128
      %p130 = scmp.eq.s32.totalorder %s29, 0
      %p131 = por %p129, %p130
      %s133 = sadd.s32 %s132, 1
      %p136 = scmp.eq.s32.totalorder %s23, 11
      %p137 = scmp.ne.s32.totalorder %s132, %s134
      %p138 = scmp.eq.s32.totalorder %s23, 0
      %p139 = por %p137, %p138
      %p140 = scmp.ne.s32.totalorder %s132, %s134
      %p141 = scmp.eq.s32.totalorder %s28, 11
      %p142 = por %p140, %p141
      %p143 = scmp.ne.s32.totalorder %s134, %s135
      %p144 = scmp.eq.s32.totalorder %s28, 0
      %p145 = por %p143, %p144
      %p146 = scmp.ne.s32.totalorder %s134, %s135
      %p147 = scmp.eq.s32.totalorder %s29, 11
      %p148 = por %p146, %p147
      %p150 = scmp.ne.s32.totalorder %s135, %s149
      %p151 = scmp.eq.s32.totalorder %s29, 0
      %p152 = por %p150, %p151
      %s154 = sadd.s32 %s153, 1
      %p157 = scmp.eq.s32.totalorder %s23, 11
      %p158 = scmp.ne.s32.totalorder %s153, %s155
      %p159 = scmp.eq.s32.totalorder %s23, 0
      %p160 = por %p158, %p159
      %p161 = scmp.ne.s32.totalorder %s153, %s155
      %p162 = scmp.eq.s32.totalorder %s28, 11
      %p163 = por %p161, %p162
      %p164 = scmp.ne.s32.totalorder %s155, %s156
      %p165 = scmp.eq.s32.totalorder %s28, 0
      %p166 = por %p164, %p165
      %p167 = scmp.ne.s32.totalorder %s155, %s156
      %p168 = scmp.eq.s32.totalorder %s29, 11
      %p169 = por %p167, %p168
      %p171 = scmp.ne.s32.totalorder %s156, %s170
      %p172 = scmp.eq.s32.totalorder %s29, 0
      %p173 = por %p171, %p172
      %s174 = ssub.s32 %s31, %s38
      %p175 = scmp.eq.s32.totalorder %s174, 0
      %s177 = sadd.s32 %s176, 1
      %s178 = scalar_select %p175, %s176, %s177
      %p181 = pneg %p175
      %p182 = scmp.eq.s32.totalorder %s23, 11
      %p183 = por %p181, %p182
      %p184 = scmp.ne.s32.totalorder %s176, %s179
      %p185 = scmp.eq.s32.totalorder %s23, 0
      %p186 = por %p184, %p185
      %p187 = scmp.ne.s32.totalorder %s176, %s179
      %p188 = scmp.eq.s32.totalorder %s28, 11
      %p189 = por %p187, %p188
      %p190 = scmp.ne.s32.totalorder %s179, %s180
      %p191 = scmp.eq.s32.totalorder %s28, 0
      %p192 = por %p190, %p191
      %p193 = scmp.ne.s32.totalorder %s179, %s180
      %p194 = scmp.eq.s32.totalorder %s29, 11
      %p195 = por %p193, %p194
      %p197 = scmp.ne.s32.totalorder %s180, %s196
      %p198 = scmp.eq.s32.totalorder %s29, 0
      %p199 = por %p197, %p198
      %s200 = ssub.s32 %s31, %s38
      %p201 = scmp.eq.s32.totalorder %s200, 0
      %s203 = sadd.s32 %s202, 1
      %s204 = scalar_select %p201, %s202, %s203
      %p207 = pneg %p201
      %p208 = scmp.eq.s32.totalorder %s23, 11
      %p209 = por %p207, %p208
      %p210 = scmp.ne.s32.totalorder %s202, %s205
      %p211 = scmp.eq.s32.totalorder %s23, 0
      %p212 = por %p210, %p211
      %p213 = scmp.ne.s32.totalorder %s202, %s205
      %p214 = scmp.eq.s32.totalorder %s28, 11
      %p215 = por %p213, %p214
      %p216 = scmp.ne.s32.totalorder %s205, %s206
      %p217 = scmp.eq.s32.totalorder %s28, 0
      %p218 = por %p216, %p217
      %p219 = scmp.ne.s32.totalorder %s205, %s206
      %p220 = scmp.eq.s32.totalorder %s29, 11
      %p221 = por %p219, %p220
      %p223 = scmp.ne.s32.totalorder %s206, %s222
      %p224 = scmp.eq.s32.totalorder %s29, 0
      %p225 = por %p223, %p224
      %s226 = ssub.s32 %s31, %s38
      %p227 = scmp.eq.s32.totalorder %s226, 0
      %s229 = sadd.s32 %s228, 1
      %s230 = scalar_select %p227, %s228, %s229
      %p233 = pneg %p227
      %p234 = scmp.eq.s32.totalorder %s23, 11
      %p235 = por %p233, %p234
      %p236 = scmp.ne.s32.totalorder %s228, %s231
      %p237 = scmp.eq.s32.totalorder %s23, 0
      %p238 = por %p236, %p237
      %p239 = scmp.ne.s32.totalorder %s228, %s231
      %p240 = scmp.eq.s32.totalorder %s28, 11
      %p241 = por %p239, %p240
      %p242 = scmp.ne.s32.totalorder %s231, %s232
      %p243 = scmp.eq.s32.totalorder %s28, 0
      %p244 = por %p242, %p243
      %p245 = scmp.ne.s32.totalorder %s231, %s232
      %p246 = scmp.eq.s32.totalorder %s29, 11
      %p247 = por %p245, %p246
      %p249 = scmp.ne.s32.totalorder %s232, %s248
      %p250 = scmp.eq.s32.totalorder %s29, 0
      %p251 = por %p249, %p250
      %s252 = ssub.s32 %s31, %s38
      %p253 = scmp.eq.s32.totalorder %s252, 0
      %s255 = sadd.s32 %s254, 1
      %s256 = scalar_select %p253, %s254, %s255
      %p259 = pneg %p253
      %p260 = scmp.eq.s32.totalorder %s23, 11
      %p261 = por %p259, %p260
      %p262 = scmp.ne.s32.totalorder %s254, %s257
      %p263 = scmp.eq.s32.totalorder %s23, 0
      %p264 = por %p262, %p263
      %p265 = scmp.ne.s32.totalorder %s254, %s257
      %p266 = scmp.eq.s32.totalorder %s28, 11
      %p267 = por %p265, %p266
      %p268 = scmp.ne.s32.totalorder %s257, %s258
      %p269 = scmp.eq.s32.totalorder %s28, 0
      %p270 = por %p268, %p269
      %p271 = scmp.ne.s32.totalorder %s257, %s258
      %p272 = scmp.eq.s32.totalorder %s29, 11
      %p273 = por %p271, %p272
      %p275 = scmp.ne.s32.totalorder %s258, %s274
      %p276 = scmp.eq.s32.totalorder %s29, 0
      %p277 = por %p275, %p276
      %s278 = ssub.s32 %s31, %s38
      %p279 = scmp.eq.s32.totalorder %s278, 0
      %s281 = sadd.s32 %s280, 1
      %s282 = scalar_select %p279, %s280, %s281
      %p285 = pneg %p279
      %p286 = scmp.eq.s32.totalorder %s23, 11
      %p287 = por %p285, %p286
      %p288 = scmp.ne.s32.totalorder %s280, %s283
      %p289 = scmp.eq.s32.totalorder %s23, 0
      %p290 = por %p288, %p289
      %p291 = scmp.ne.s32.totalorder %s280, %s283
      %p292 = scmp.eq.s32.totalorder %s28, 11
      %p293 = por %p291, %p292
      %p294 = scmp.ne.s32.totalorder %s283, %s284
      %p295 = scmp.eq.s32.totalorder %s28, 0
      %p296 = por %p294, %p295
      %p297 = scmp.ne.s32.totalorder %s283, %s284
      %p298 = scmp.eq.s32.totalorder %s29, 11
      %p299 = por %p297, %p298
      %p301 = scmp.ne.s32.totalorder %s284, %s300
      %p302 = scmp.eq.s32.totalorder %s29, 0
      %p303 = por %p301, %p302
      %s304 = ssub.s32 %s31, %s38
      %p305 = scmp.eq.s32.totalorder %s304, 0
      %s307 = sadd.s32 %s306, 1
      %s308 = scalar_select %p305, %s306, %s307
      %p311 = pneg %p305
      %p312 = scmp.eq.s32.totalorder %s23, 11
      %p313 = por %p311, %p312
      %p314 = scmp.ne.s32.totalorder %s306, %s309
      %p315 = scmp.eq.s32.totalorder %s23, 0
      %p316 = por %p314, %p315
      %p317 = scmp.ne.s32.totalorder %s306, %s309
      %p318 = scmp.eq.s32.totalorder %s28, 11
      %p319 = por %p317, %p318
      %p320 = scmp.ne.s32.totalorder %s309, %s310
      %p321 = scmp.eq.s32.totalorder %s28, 0
      %p322 = por %p320, %p321
      %p323 = scmp.ne.s32.totalorder %s309, %s310
      %p324 = scmp.eq.s32.totalorder %s29, 11
      %p325 = por %p323, %p324
      %p327 = scmp.ne.s32.totalorder %s310, %s326
      %p328 = scmp.eq.s32.totalorder %s29, 0
      %p329 = por %p327, %p328
      %s330 = ssub.s32 %s31, %s38
      %p331 = scmp.eq.s32.totalorder %s330, 0
      %s333 = sadd.s32 %s332, 1
      %s334 = scalar_select %p331, %s332, %s333
      %p337 = pneg %p331
      %p338 = scmp.eq.s32.totalorder %s23, 11
      %p339 = por %p337, %p338
      %p340 = scmp.ne.s32.totalorder %s332, %s335
      %p341 = scmp.eq.s32.totalorder %s23, 0
      %p342 = por %p340, %p341
      %p343 = scmp.ne.s32.totalorder %s332, %s335
      %p344 = scmp.eq.s32.totalorder %s28, 11
      %p345 = por %p343, %p344
      %p346 = scmp.ne.s32.totalorder %s335, %s336
      %p347 = scmp.eq.s32.totalorder %s28, 0
      %p348 = por %p346, %p347
      %p349 = scmp.ne.s32.totalorder %s335, %s336
      %p350 = scmp.eq.s32.totalorder %s29, 11
      %p351 = por %p349, %p350
      %p353 = scmp.ne.s32.totalorder %s336, %s352
      %p354 = scmp.eq.s32.totalorder %s29, 0
      %p355 = por %p353, %p354
      %s356 = ssub.s32 %s30, %s42
      %p357 = scmp.eq.s32.totalorder %s356, 0
      %s359 = sadd.s32 %s358, 1
      %s360 = scalar_select %p357, %s358, %s359
      %p363 = pneg %p357
      %p364 = scmp.eq.s32.totalorder %s23, 11
      %p365 = por %p363, %p364
      %p366 = scmp.ne.s32.totalorder %s358, %s361
      %p367 = scmp.eq.s32.totalorder %s23, 0
      %p368 = por %p366, %p367
      %p369 = scmp.ne.s32.totalorder %s358, %s361
      %p370 = scmp.eq.s32.totalorder %s28, 11
      %p371 = por %p369, %p370
      %p372 = scmp.ne.s32.totalorder %s361, %s362
      %p373 = scmp.eq.s32.totalorder %s28, 0
      %p374 = por %p372, %p373
      %p375 = scmp.ne.s32.totalorder %s361, %s362
      %p376 = scmp.eq.s32.totalorder %s29, 11
      %p377 = por %p375, %p376
      %p379 = scmp.ne.s32.totalorder %s362, %s378
      %p380 = scmp.eq.s32.totalorder %s29, 0
      %p381 = por %p379, %p380
      %p382 = scmp.le.s32.totalorder 1, %s23
      %p383 = scmp.lt.s32.totalorder %s23, 13
      %p384 = pnand %p382, %p383
      %p385 = pneg %p384
      // Predicated region
      $region9: #{tpu_custom_call.1} parent=5 // pred_check
        _
      $region10: #{tpu_custom_call.1} parent=5 // pred_check_branch
        %387 = sbr.rel (%p384) target = $region12
      $region11: #{tpu_custom_call.1} parent=5 // pred_region
        %s388 = ssub.s32 %s23, 1
        // Predicated region
        $region13: #{tpu_custom_call.1} parent=11 // pred_check
          %p389 = pneg %p82
        $region14: #{tpu_custom_call.1} parent=11 // pred_check_branch
          %391 = sbr.rel (%p389) target = $region16
        $region15: #{tpu_custom_call.1} parent=11 // pred_region
          %s393 = ssub.s32 16, 16
          %394 = vsyncadd [#allocation6], %s393
          %s396 = sshll.u32 %s1, 4
          %s397 = int_to_ptr.vmem [resolvable:$true] %s396
          %399 = dma.vmem_to_smem %s397, 16, [#allocation4], [#allocation6]
        $region16: #{tpu_custom_call.1} parent=11 // pred_fallthru
          _
        // Predicated region
        $region17: #{tpu_custom_call.1} parent=11 // pred_check
          %p400 = pneg %p103
        $region18: #{tpu_custom_call.1} parent=11 // pred_check_branch
          %402 = sbr.rel (%p400) target = $region20
        $region19: #{tpu_custom_call.1} parent=11 // pred_region
          _
        $region20: #{tpu_custom_call.1} parent=11 // pred_fallthru
          _
        // Predicated region
        $region21: #{tpu_custom_call.1} parent=11 // pred_check
          %p403 = pneg %p124
        $region22: #{tpu_custom_call.1} parent=11 // pred_check_branch
          %405 = sbr.rel (%p403) target = $region24
        $region23: #{tpu_custom_call.1} parent=11 // pred_region
          _
        $region24: #{tpu_custom_call.1} parent=11 // pred_fallthru
          _
        // Predicated region
        $region25: #{tpu_custom_call.1} parent=11 // pred_check
          %p406 = pneg %p145
        $region26: #{tpu_custom_call.1} parent=11 // pred_check_branch
          %408 = sbr.rel (%p406) target = $region28
        $region27: #{tpu_custom_call.1} parent=11 // pred_region
          _
        $region28: #{tpu_custom_call.1} parent=11 // pred_fallthru
          _
        // Predicated region
        $region29: #{tpu_custom_call.1} parent=11 // pred_check
          %p409 = pneg %p166
        $region30: #{tpu_custom_call.1} parent=11 // pred_check_branch
          %411 = sbr.rel (%p409) target = $region32
        $region31: #{tpu_custom_call.1} parent=11 // pred_region
          _
        $region32: #{tpu_custom_call.1} parent=11 // pred_fallthru
          _
      $region12: #{tpu_custom_call.1} parent=5 // pred_fallthru
        _
      %p412 = scmp.lt.s32.totalorder %s23, 12
      // Predicated region
      $region33: #{tpu_custom_call.1} parent=5 // pred_check
        %p413 = pneg %p412
      $region34: #{tpu_custom_call.1} parent=5 // pred_check_branch
        %415 = sbr.rel (%p413) target = $region36
      $region35: #{tpu_custom_call.1} parent=5 // pred_region
        // Predicated region
        $region37: #{tpu_custom_call.1} parent=35 // pred_check
          %p416 = pneg %p55
        $region38: #{tpu_custom_call.1} parent=35 // pred_check_branch
          %418 = sbr.rel (%p416) target = $region40
        $region39: #{tpu_custom_call.1} parent=35 // pred_region
          %p419 = scmp.lt.s32.totalorder %s30, 1
          %s420 = scalar_select %p419, %s30, 1
          %s421 = smul.addr %s420, 2
          %s422 = smul.addr %s421, 8
          %s423 = scalar_lea.vmem %s0, %s422
        $region40: #{tpu_custom_call.1} parent=35 // pred_fallthru
          _
        // Predicated region
        $region41: #{tpu_custom_call.1} parent=35 // pred_check
          %p424 = pneg %p186
        $region42: #{tpu_custom_call.1} parent=35 // pred_check_branch
          %426 = sbr.rel (%p424) target = $region44
        $region43: #{tpu_custom_call.1} parent=35 // pred_region
          %p427 = scmp.lt.s32.totalorder %s31, 5
          %s428 = scalar_select %p427, %s31, 5
          %s429 = smul.addr %s428, 4
          %s430 = smul.addr %s429, 4
          %s431 = scalar_lea.vmem %s6, %s430
        $region44: #{tpu_custom_call.1} parent=35 // pred_fallthru
          _
        // Predicated region
        $region45: #{tpu_custom_call.1} parent=35 // pred_check
          %p432 = pneg %p212
        $region46: #{tpu_custom_call.1} parent=35 // pred_check_branch
          %434 = sbr.rel (%p432) target = $region48
        $region47: #{tpu_custom_call.1} parent=35 // pred_region
          %p435 = scmp.lt.s32.totalorder %s31, 5
          %s436 = scalar_select %p435, %s31, 5
          %s437 = smul.addr %s436, 4
          %s438 = smul.addr %s437, 8
          %s439 = scalar_lea.vmem %s7, %s438
        $region48: #{tpu_custom_call.1} parent=35 // pred_fallthru
          _
        // Predicated region
        $region49: #{tpu_custom_call.1} parent=35 // pred_check
          %p440 = pneg %p238
        $region50: #{tpu_custom_call.1} parent=35 // pred_check_branch
          %442 = sbr.rel (%p440) target = $region52
        $region51: #{tpu_custom_call.1} parent=35 // pred_region
          %p443 = scmp.lt.s32.totalorder %s31, 5
          %s444 = scalar_select %p443, %s31, 5
          %s445 = smul.addr %s444, 4
          %s446 = smul.addr %s445, 8
          %s447 = scalar_lea.vmem %s8, %s446
        $region52: #{tpu_custom_call.1} parent=35 // pred_fallthru
          _
        // Predicated region
        $region53: #{tpu_custom_call.1} parent=35 // pred_check
          %p448 = pneg %p264
        $region54: #{tpu_custom_call.1} parent=35 // pred_check_branch
          %450 = sbr.rel (%p448) target = $region56
        $region55: #{tpu_custom_call.1} parent=35 // pred_region
          %p451 = scmp.lt.s32.totalorder %s31, 5
          %s452 = scalar_select %p451, %s31, 5
          %s453 = smul.addr %s452, 4
          %s454 = smul.addr %s453, 8
          %s455 = scalar_lea.vmem %s9, %s454
        $region56: #{tpu_custom_call.1} parent=35 // pred_fallthru
          _
        // Predicated region
        $region57: #{tpu_custom_call.1} parent=35 // pred_check
          %p456 = pneg %p290
        $region58: #{tpu_custom_call.1} parent=35 // pred_check_branch
          %458 = sbr.rel (%p456) target = $region60
        $region59: #{tpu_custom_call.1} parent=35 // pred_region
          %p459 = scmp.lt.s32.totalorder %s31, 5
          %s460 = scalar_select %p459, %s31, 5
          %s461 = smul.addr %s460, 4
          %s462 = smul.addr %s461, 8
          %s463 = scalar_lea.vmem %s10, %s462
        $region60: #{tpu_custom_call.1} parent=35 // pred_fallthru
          _
        // Predicated region
        $region61: #{tpu_custom_call.1} parent=35 // pred_check
          %p464 = pneg %p316
        $region62: #{tpu_custom_call.1} parent=35 // pred_check_branch
          %466 = sbr.rel (%p464) target = $region64
        $region63: #{tpu_custom_call.1} parent=35 // pred_region
          %p467 = scmp.lt.s32.totalorder %s31, 5
          %s468 = scalar_select %p467, %s31, 5
          %s469 = smul.addr %s468, 4
          %s470 = smul.addr %s469, 4
          %s471 = scalar_lea.vmem %s11, %s470
        $region64: #{tpu_custom_call.1} parent=35 // pred_fallthru
          _
        // Predicated region
        $region65: #{tpu_custom_call.1} parent=35 // pred_check
          %p472 = pneg %p342
        $region66: #{tpu_custom_call.1} parent=35 // pred_check_branch
          %474 = sbr.rel (%p472) target = $region68
        $region67: #{tpu_custom_call.1} parent=35 // pred_region
          %p475 = scmp.lt.s32.totalorder %s31, 5
          %s476 = scalar_select %p475, %s31, 5
          %s477 = smul.addr %s476, 4
          %s478 = smul.addr %s477, 8
          %s479 = scalar_lea.vmem %s12, %s478
        $region68: #{tpu_custom_call.1} parent=35 // pred_fallthru
          _
      $region36: #{tpu_custom_call.1} parent=5 // pred_fallthru
        _
      %p480 = scmp.le.s32.totalorder 1, %s23
      %p481 = scmp.lt.s32.totalorder %s23, 13
      %p482 = pnand %p480, %p481
      %p483 = pneg %p482
      // Predicated region
      $region69: #{tpu_custom_call.1} parent=5 // pred_check
        _
      $region70: #{tpu_custom_call.1} parent=5 // pred_check_branch
        %485 = sbr.rel (%p482) target = $region72
      $region71: #{tpu_custom_call.1} parent=5 // pred_region
        %s486 = ssub.s32 %s23, 1
        // Predicated region
        $region73: #{tpu_custom_call.1} parent=71 // pred_check
          %p487 = pneg %p82
        $region74: #{tpu_custom_call.1} parent=71 // pred_check_branch
          %489 = sbr.rel (%p487) target = $region76
        $region75: #{tpu_custom_call.1} parent=71 // pred_region
          %490 = dma.done [#allocation6], 16
        $region76: #{tpu_custom_call.1} parent=71 // pred_fallthru
          _
        %491 = sfence
        %p492 = scmp.lt.s32.totalorder %s32, 1
        %s493 = scalar_select %p492, %s32, 1
        %s494 = smul.addr %s493, 2
        %s495 = smul.addr %s494, 8
        %s496 = scalar_lea.vmem %s0, %s495
        %p497 = pneg %p61
        %p498 = pneg %p58
        %p499 = pneg %p82
        %p500 = pneg %p79
        %p501 = pneg %p103
        %p502 = pneg %p100
        %p503 = pneg %p124
        %p504 = pneg %p121
        %p505 = pneg %p145
        %p506 = pneg %p142
        %p507 = pneg %p166
        %p508 = pneg %p163
        %p509 = scmp.lt.s32.totalorder %s33, 5
        %s510 = scalar_select %p509, %s33, 5
        %s511 = smul.addr %s510, 4
        %s512 = smul.addr %s511, 4
        %s513 = scalar_lea.vmem %s6, %s512
        %p514 = pneg %p192
        %p515 = pneg %p189
        %p516 = scmp.lt.s32.totalorder %s33, 5
        %s517 = scalar_select %p516, %s33, 5
        %s518 = smul.addr %s517, 4
        %s519 = smul.addr %s518, 8
        %s520 = scalar_lea.vmem %s7, %s519
        %p521 = pneg %p218
        %p522 = pneg %p215
        %p523 = scmp.lt.s32.totalorder %s33, 5
        %s524 = scalar_select %p523, %s33, 5
        %s525 = smul.addr %s524, 4
        %s526 = smul.addr %s525, 8
        %s527 = scalar_lea.vmem %s8, %s526
        %p528 = pneg %p244
        %p529 = pneg %p241
        %p530 = scmp.lt.s32.totalorder %s33, 5
        %s531 = scalar_select %p530, %s33, 5
        %s532 = smul.addr %s531, 4
        %s533 = smul.addr %s532, 8
        %s534 = scalar_lea.vmem %s9, %s533
        %p535 = pneg %p270
        %p536 = pneg %p267
        %p537 = scmp.lt.s32.totalorder %s33, 5
        %s538 = scalar_select %p537, %s33, 5
        %s539 = smul.addr %s538, 4
        %s540 = smul.addr %s539, 8
        %s541 = scalar_lea.vmem %s10, %s540
        %p542 = pneg %p296
        %p543 = pneg %p293
        %p544 = scmp.lt.s32.totalorder %s33, 5
        %s545 = scalar_select %p544, %s33, 5
        %s546 = smul.addr %s545, 4
        %s547 = smul.addr %s546, 4
        %s548 = scalar_lea.vmem %s11, %s547
        %p549 = pneg %p322
        %p550 = pneg %p319
        %p551 = scmp.lt.s32.totalorder %s33, 5
        %s552 = scalar_select %p551, %s33, 5
        %s553 = smul.addr %s552, 4
        %s554 = smul.addr %s553, 8
        %s555 = scalar_lea.vmem %s12, %s554
        %p556 = pneg %p348
        %p557 = pneg %p345
        %p558 = pneg %p374
        %p559 = pneg %p371
        %s560 = sand.u32 %s361, 1
        %s561 = scalar_lea.sflag [#allocation5], %s560
        %s562 = sand.u32 %s361, 1
        %s563 = smul.addr %s562, 16
        %s564 = scalar_lea.vmem [#allocation7], %s563
        %p565 = scmp.lt.s32.totalorder %s32, 1
        %s566 = scalar_select %p565, %s32, 1
        %s567 = smul.addr %s566, 2
        %s568 = smul.addr %s567, 8
        %s569 = scalar_lea.vmem %s0, %s568
        %p570 = scmp.lt.s32.totalorder %s33, 5
        %s571 = scalar_select %p570, %s33, 5
        %s572 = smul.addr %s571, 4
        %s573 = smul.addr %s572, 4
        %s574 = scalar_lea.vmem %s6, %s573
        %p575 = scmp.lt.s32.totalorder %s33, 5
        %s576 = scalar_select %p575, %s33, 5
        %s577 = smul.addr %s576, 4
        %s578 = smul.addr %s577, 8
        %s579 = scalar_lea.vmem %s7, %s578
        %p580 = scmp.lt.s32.totalorder %s33, 5
        %s581 = scalar_select %p580, %s33, 5
        %s582 = smul.addr %s581, 4
        %s583 = smul.addr %s582, 8
        %s584 = scalar_lea.vmem %s8, %s583
        %p585 = scmp.lt.s32.totalorder %s33, 5
        %s586 = scalar_select %p585, %s33, 5
        %s587 = smul.addr %s586, 4
        %s588 = smul.addr %s587, 8
        %s589 = scalar_lea.vmem %s9, %s588
        %p590 = scmp.lt.s32.totalorder %s33, 5
        %s591 = scalar_select %p590, %s33, 5
        %s592 = smul.addr %s591, 4
        %s593 = smul.addr %s592, 8
        %s594 = scalar_lea.vmem %s10, %s593
        %p595 = scmp.lt.s32.totalorder %s33, 5
        %s596 = scalar_select %p595, %s33, 5
        %s597 = smul.addr %s596, 4
        %s598 = smul.addr %s597, 4
        %s599 = scalar_lea.vmem %s11, %s598
        %p600 = scmp.lt.s32.totalorder %s33, 5
        %s601 = scalar_select %p600, %s33, 5
        %s602 = smul.addr %s601, 4
        %s603 = smul.addr %s602, 8
        %s604 = scalar_lea.vmem %s12, %s603
        %v606 = vlaneseq
        %v607 = vand.u32 %v606, 127
        %p608 = scmp.eq.s32.totalorder %s33, 0
        // Predicated region
        $region77: #{tpu_custom_call.1} parent=71 // pred_check
          %p609 = pneg %p608
        $region78: #{tpu_custom_call.1} parent=71 // pred_check_branch
          %611 = sbr.rel (%p609) target = $region80
        $region79: #{tpu_custom_call.1} parent=71 // pred_region
          %v612 = vld [vmem:[%s569] sm:$0xff]
          %v613 = vld [vmem:[%s569 + $0x8] sm:$0xff]
          %v614 = vadd.f32 %v612, %v613
          %615 = vadd.xlane.f32.xlu0 %v614
          %v616 = vpop.xlane.xlu0 %615
          %v617 = vrot.slane %v616, 4
          %v618 = vadd.f32 %v616, %v617
          %v619 = vrot.slane %v618, 2
          %v620 = vadd.f32 %v618, %v619
          %v621 = vrot.slane %v620, 1
          %v622 = vadd.f32 %v620, %v621
          %s623 = vtos %v622
          %v624 = vmul.f32 %v612, %v612
          %v625 = vmul.f32 %v613, %v613
          %v626 = vadd.f32 %v624, %v625
          %627 = vadd.xlane.f32.xlu0 %v626
          %v628 = vpop.xlane.xlu0 %627
          %v629 = vrot.slane %v628, 4
          %v630 = vadd.f32 %v628, %v629
          %v631 = vrot.slane %v630, 2
          %v632 = vadd.f32 %v630, %v631
          %v633 = vrot.slane %v632, 1
          %v634 = vadd.f32 %v632, %v633
          %s635 = vtos %v634
          %s636 = smul.f32 %s623, 0.00048828125
          %s637 = smul.f32 %s635, 0.00048828125
          %s638 = smul.f32 %s636, %s636
          %s639 = ssub.f32 %s637, %s638
          %s640 = smax.f32 %s639, 0.0
          %v641 = vstv %s636
          %v642 = vsub.f32 %v612, %v641
          %v643 = vsub.f32 %v613, %v641
          %s644 = sadd.f32 %s640, 1e-08
          %v645 = vstv %s644
          %v646 = vrsqrt.pop %v645
          %s647 = vtos %v646
          %v648 = vstv %s647
          %v649 = vmul.f32 %v642, %v648
          %v650 = vmul.f32 %v643, %v648
          %v651 = vld [vmem:[%s2] sm:$0xf]
          %v652 = vld [vmem:[%s2 + $0x4] sm:$0xf]
          %v653 = vpack.c.bf16 %v650, %v649
          %v654 = vld [vmem:[%s3] sm:$0xff]
          %v655 = vld [vmem:[%s3 + $0x8] sm:$0xff]
          %657 = vset.pattern.permute.xlu0 0
          %658 = vperm.xlu0 %657, %v654
          %v659 = vpop.permute.xlu0 %658
          %662 = vset.pattern.permute.xlu0 0
          %663 = vperm.xlu0 %662, %v655
          %v664 = vpop.permute.xlu0 %663
          %v668 = vunpack.c.l.b16 %v651
          %v669 = vunpack.c.l.b16 %v652
          %v670 = vpack.c.b16 %v669, %v668
          %vm671 = vcmask 130048
          %v673 = vsel %vm671, %v670, 0
          %675 = vmatprep.subr.bf16.mxu0 0
          %676 = vmatpush1.bf16.msra.mxu0 %v653
          %677 = vmatprep.subr.bf16.mxu0 0
          %678 = vmatpush1.bf16.msra.mxu0 0
          %679 = vmatprep.subr.bf16.mxu0 0
          %680 = vmatpush1.bf16.msra.mxu0 0
          %681 = vmatprep.subr.bf16.mxu0 0
          %682 = vmatpush1.bf16.msra.mxu0 0
          %683 = vmatprep.subr.bf16.mxu0 0
          %684 = vmatpush1.bf16.msra.mxu0 0
          %685 = vmatprep.subr.bf16.mxu0 0
          %686 = vmatpush1.bf16.msra.mxu0 0
          %687 = vmatprep.subr.bf16.mxu0 0
          %688 = vmatpush1.bf16.msra.mxu0 0
          %689 = vmatprep.subr.bf16.mxu0 0
          %690 = vmatpush1.bf16.msra.mxu0 0
          %691 = vmatprep.subr.bf16.mxu0 0
          %692 = vmatpush1.bf16.msra.mxu0 0
          %693 = vmatprep.subr.bf16.mxu0 0
          %694 = vmatpush1.bf16.msra.mxu0 0
          %695 = vmatprep.subr.bf16.mxu0 0
          %696 = vmatpush1.bf16.msra.mxu0 0
          %697 = vmatprep.subr.bf16.mxu0 0
          %698 = vmatpush1.bf16.msra.mxu0 0
          %699 = vmatprep.subr.bf16.mxu0 0
          %700 = vmatpush1.bf16.msra.mxu0 0
          %701 = vmatprep.subr.bf16.mxu0 0
          %702 = vmatpush1.bf16.msra.mxu0 0
          %703 = vmatprep.subr.bf16.mxu0 0
          %704 = vmatpush1.bf16.msra.mxu0 0
          %705 = vmatprep.subr.bf16.mxu0 0
          %706 = vmatpush1.bf16.msra.mxu0 0
          %707 = vmatprep.mubr.bf16.mxu0 0
          %708 = vmatmul.mubr.bf16.gmra.mrb[0].mxu0 %v673
          %v709 = vpop.f32.mrb[0].mxu0
          %v710 = vadd.f32 %v659, %v709
          %v711 = vpop.f32.mrb[0].mxu0
          %v712 = vpop.f32.mrb[0].mxu0
          %v713 = vadd.f32 %v664, %v712
          %v714 = vpop.f32.mrb[0].mxu0
          %715 = vdwg.mxu0
          %716 = vst [vmem:[#allocation2] sm:$0xff] %v710
          %717 = vst [vmem:[#allocation2 + $0x8] sm:$0xff] %v713
          %718 = vst [vmem:[#allocation3] sm:$0xff] 0.0
          %719 = vst [vmem:[#allocation3 + $0x8] sm:$0xff] 0.0
        $region80: #{tpu_custom_call.1} parent=71 // pred_fallthru
          _
        %s720 = smul.u32 %s33, 2
        %s721 = sld [smem:[#allocation4 + %s720]]
        %s722 = sadd.s32 %s720, 1
        %s723 = sld [smem:[#allocation4 + %s722]]
        %v724 = vld [vmem:[#allocation2] sm:$0xff]
        %v725 = vld [vmem:[#allocation2 + $0x8] sm:$0xff]
        %v726 = vld [vmem:[%s574] sm:$0xf]
        %v727 = vld [vmem:[%s574 + $0x4] sm:$0xf]
        %v728 = vld [vmem:[%s574 + $0x8] sm:$0xf]
        %v729 = vld [vmem:[%s574 + $0xc] sm:$0xf]
        %v730 = vpack.c.bf16 %v725, %v724
        %v731 = vld [vmem:[%s579] sm:$0xff]
        %v732 = vld [vmem:[%s579 + $0x8] sm:$0xff]
        %v733 = vld [vmem:[%s579 + $0x10] sm:$0xff]
        %v734 = vld [vmem:[%s579 + $0x18] sm:$0xff]
        %736 = vset.pattern.permute.xlu0 0
        %737 = vperm.xlu0 %736, %v731
        %v738 = vpop.permute.xlu0 %737
        %741 = vset.pattern.permute.xlu0 0
        %742 = vperm.xlu0 %741, %v732
        %v743 = vpop.permute.xlu0 %742
        %746 = vset.pattern.permute.xlu0 0
        %747 = vperm.xlu0 %746, %v733
        %v748 = vpop.permute.xlu0 %747
        %751 = vset.pattern.permute.xlu0 0
        %752 = vperm.xlu0 %751, %v734
        %v753 = vpop.permute.xlu0 %752
        %v759 = vunpack.c.l.b16 %v726
        %v760 = vunpack.c.l.b16 %v727
        %v761 = vunpack.c.l.b16 %v728
        %v762 = vunpack.c.l.b16 %v729
        %v763 = vpack.c.b16 %v760, %v759
        %v764 = vpack.c.b16 %v762, %v761
        %vm765 = vcmask 130048
        %v767 = vsel %vm765, %v763, 0
        %v770 = vsel %vm765, %v764, 0
        %772 = vmatprep.subr.bf16.mxu0 0
        %773 = vmatpush1.bf16.msra.mxu0 %v730
        %774 = vmatprep.subr.bf16.mxu0 0
        %775 = vmatpush1.bf16.msra.mxu0 0
        %776 = vmatprep.subr.bf16.mxu0 0
        %777 = vmatpush1.bf16.msra.mxu0 0
        %778 = vmatprep.subr.bf16.mxu0 0
        %779 = vmatpush1.bf16.msra.mxu0 0
        %780 = vmatprep.subr.bf16.mxu0 0
        %781 = vmatpush1.bf16.msra.mxu0 0
        %782 = vmatprep.subr.bf16.mxu0 0
        %783 = vmatpush1.bf16.msra.mxu0 0
        %784 = vmatprep.subr.bf16.mxu0 0
        %785 = vmatpush1.bf16.msra.mxu0 0
        %786 = vmatprep.subr.bf16.mxu0 0
        %787 = vmatpush1.bf16.msra.mxu0 0
        %788 = vmatprep.subr.bf16.mxu0 0
        %789 = vmatpush1.bf16.msra.mxu0 0
        %790 = vmatprep.subr.bf16.mxu0 0
        %791 = vmatpush1.bf16.msra.mxu0 0
        %792 = vmatprep.subr.bf16.mxu0 0
        %793 = vmatpush1.bf16.msra.mxu0 0
        %794 = vmatprep.subr.bf16.mxu0 0
        %795 = vmatpush1.bf16.msra.mxu0 0
        %796 = vmatprep.subr.bf16.mxu0 0
        %797 = vmatpush1.bf16.msra.mxu0 0
        %798 = vmatprep.subr.bf16.mxu0 0
        %799 = vmatpush1.bf16.msra.mxu0 0
        %800 = vmatprep.subr.bf16.mxu0 0
        %801 = vmatpush1.bf16.msra.mxu0 0
        %802 = vmatprep.subr.bf16.mxu0 0
        %803 = vmatpush1.bf16.msra.mxu0 0
        %804 = vmatprep.mubr.bf16.mxu0 0
        %805 = vmatmul.mubr.bf16.gmra.mrb[0].mxu0 %v767
        %v806 = vpop.f32.mrb[0].mxu0
        %v807 = vadd.f32 %v738, %v806
        %v808 = vpop.f32.mrb[0].mxu0
        %v809 = vpop.f32.mrb[0].mxu0
        %v810 = vadd.f32 %v743, %v809
        %v811 = vpop.f32.mrb[0].mxu0
        %812 = vmatprep.mubr.bf16.mxu0 0
        %813 = vmatmul.mubr.bf16.gmra.mrb[0].mxu0 %v770
        %v814 = vpop.f32.mrb[0].mxu0
        %v815 = vadd.f32 %v748, %v814
        %v816 = vpop.f32.mrb[0].mxu0
        %v817 = vpop.f32.mrb[0].mxu0
        %v818 = vadd.f32 %v753, %v817
        %v819 = vpop.f32.mrb[0].mxu0
        %820 = vdwg.mxu0
        %vm821 = vcmp.gt.f32.partialorder %v807, 0.0
        %vm822 = vcmp.gt.f32.partialorder %v810, 0.0
        %vm823 = vcmp.gt.f32.partialorder %v815, 0.0
        %vm824 = vcmp.gt.f32.partialorder %v818, 0.0
        %v825 = vstv %s721
        %v826 = vmul.f32 %v825, %v807
        %v827 = vmul.f32 %v825, %v810
        %v828 = vmul.f32 %v825, %v815
        %v829 = vmul.f32 %v825, %v818
        %v830 = vsel %vm821, %v807, %v826
        %v831 = vsel %vm822, %v810, %v827
        %v832 = vsel %vm823, %v815, %v828
        %v833 = vsel %vm824, %v818, %v829
        %v834 = vld [vmem:[%s584] sm:$0xff]
        %v835 = vld [vmem:[%s584 + $0x8] sm:$0xff]
        %v836 = vld [vmem:[%s584 + $0x10] sm:$0xff]
        %v837 = vld [vmem:[%s584 + $0x18] sm:$0xff]
        %v838 = vadd.f32 %v830, %v831
        %v839 = vadd.f32 %v838, %v832
        %v840 = vadd.f32 %v839, %v833
        %841 = vadd.xlane.f32.xlu0 %v840
        %v842 = vpop.xlane.xlu0 %841
        %v843 = vrot.slane %v842, 4
        %v844 = vadd.f32 %v842, %v843
        %v845 = vrot.slane %v844, 2
        %v846 = vadd.f32 %v844, %v845
        %v847 = vrot.slane %v846, 1
        %v848 = vadd.f32 %v846, %v847
        %s849 = vtos %v848
        %v850 = vmul.f32 %v830, %v830
        %v851 = vmul.f32 %v831, %v831
        %v852 = vmul.f32 %v832, %v832
        %v853 = vmul.f32 %v833, %v833
        %v854 = vadd.f32 %v850, %v851
        %v855 = vadd.f32 %v854, %v852
        %v856 = vadd.f32 %v855, %v853
        %857 = vadd.xlane.f32.xlu0 %v856
        %v858 = vpop.xlane.xlu0 %857
        %v859 = vrot.slane %v858, 4
        %v860 = vadd.f32 %v858, %v859
        %v861 = vrot.slane %v860, 2
        %v862 = vadd.f32 %v860, %v861
        %v863 = vrot.slane %v862, 1
        %v864 = vadd.f32 %v862, %v863
        %s865 = vtos %v864
        %s866 = smul.f32 %s849, 0.00024414063
        %s867 = smul.f32 %s865, 0.00024414063
        %s868 = smul.f32 %s866, %s866
        %s869 = ssub.f32 %s867, %s868
        %s870 = smax.f32 %s869, 0.0
        %v871 = vstv %s866
        %v872 = vsub.f32 %v830, %v871
        %v873 = vsub.f32 %v831, %v871
        %v874 = vsub.f32 %v832, %v871
        %v875 = vsub.f32 %v833, %v871
        %s876 = sadd.f32 %s870, 1e-08
        %v877 = vstv %s876
        %v878 = vrsqrt.pop %v877
        %s879 = vtos %v878
        %v880 = vstv %s879
        %v881 = vmul.f32 %v872, %v880
        %v882 = vmul.f32 %v873, %v880
        %v883 = vmul.f32 %v874, %v880
        %v884 = vmul.f32 %v875, %v880
        %886 = vset.pattern.permute.xlu0 0
        %887 = vperm.xlu0 %886, %v834
        %v888 = vpop.permute.xlu0 %887
        %891 = vset.pattern.permute.xlu0 0
        %892 = vperm.xlu0 %891, %v835
        %v893 = vpop.permute.xlu0 %892
        %896 = vset.pattern.permute.xlu0 0
        %897 = vperm.xlu0 %896, %v836
        %v898 = vpop.permute.xlu0 %897
        %901 = vset.pattern.permute.xlu0 0
        %902 = vperm.xlu0 %901, %v837
        %v903 = vpop.permute.xlu0 %902
        %v905 = vadd.f32 %v881, %v888
        %v906 = vadd.f32 %v882, %v893
        %v907 = vadd.f32 %v883, %v898
        %v908 = vadd.f32 %v884, %v903
        %v909 = vld [vmem:[%s589] sm:$0xff]
        %v910 = vld [vmem:[%s589 + $0x8] sm:$0xff]
        %v911 = vld [vmem:[%s589 + $0x10] sm:$0xff]
        %v912 = vld [vmem:[%s589 + $0x18] sm:$0xff]
        %914 = vset.pattern.permute.xlu0 1
        %915 = vperm.xlu0 %914, %v909
        %v916 = vpop.permute.xlu0 %915
        %919 = vset.pattern.permute.xlu0 1
        %920 = vperm.xlu0 %919, %v910
        %v921 = vpop.permute.xlu0 %920
        %924 = vset.pattern.permute.xlu0 1
        %925 = vperm.xlu0 %924, %v911
        %v926 = vpop.permute.xlu0 %925
        %929 = vset.pattern.permute.xlu0 1
        %930 = vperm.xlu0 %929, %v912
        %v931 = vpop.permute.xlu0 %930
        %v933 = vmul.f32 %v905, %v916
        %v934 = vmul.f32 %v906, %v921
        %v935 = vmul.f32 %v907, %v926
        %v936 = vmul.f32 %v908, %v931
        %p937 = scmp.lt.s32.totalorder %s33, 0
        %s938 = ssub.s32 0, %s33
        %s939 = scalar_select %p937, %s938, %s33
        %s940 = sdiv.u32.pop %s939, 3
        %s941 = srem.u32.pop %s939, 3
        %s942 = ssub.s32 0, %s941
        %s943 = scalar_select %p937, %s942, %s941
        %p944 = scmp.ne.s32.totalorder %s943, 0
        %p945 = scmp.lt.s32.totalorder %s943, 0
        %p946 = pnand %p945, %p944
        %p947 = pneg %p946
        %s948 = sadd.s32 %s943, 3
        %s949 = scalar_select %p947, %s948, %s943
        %p950 = scmp.gt.s32.totalorder %s949, 0
        %s951 = scalar_select %p950, %s949, 0
        %p952 = scmp.lt.s32.totalorder %s951, 2
        %s953 = scalar_select %p952, %s951, 2
        %p954 = scmp.ne.s32.totalorder %s953, 0
        // Predicated region
        $region81: #{tpu_custom_call.1} parent=71 // pred_check
          %p955 = pneg %p954
        $region82: #{tpu_custom_call.1} parent=71 // pred_check_branch
          %957 = sbr.rel (%p955) target = $region84
        $region83: #{tpu_custom_call.1} parent=71 // pred_region
          %s958 = ssub.s32 %s953, 1
          %p959 = scmp.ne.s32.totalorder %s958, 0
          // Predicated region
          $region85: #{tpu_custom_call.1} parent=83 // pred_check
            %p960 = pneg %p959
          $region86: #{tpu_custom_call.1} parent=83 // pred_check_branch
            %962 = sbr.rel (%p960) target = $region88
          $region87: #{tpu_custom_call.1} parent=83 // pred_region
            %963 = vrot.lane.b32.xlu0 %v905, 4
            %v964 = vpop.permute.xlu0 %963
            %965 = vrot.lane.b32.xlu0 %v906, 4
            %v966 = vpop.permute.xlu0 %965
            %967 = vrot.lane.b32.xlu0 %v907, 4
            %v968 = vpop.permute.xlu0 %967
            %969 = vrot.lane.b32.xlu0 %v908, 4
            %v970 = vpop.permute.xlu0 %969
            %vm971 = vcmp.ge.s32.totalorder %v607, 4
            %v972 = vsel %vm971, 1, 0
            %vm973 = vcmp.eq.s32.totalorder %v972, 1
            %v974 = vsel %vm973, %v964, 0.0
            %v975 = vsel %vm973, %v966, 0.0
            %v976 = vsel %vm973, %v968, 0.0
            %v977 = vsel %vm973, %v970, 0.0
            %978 = vset.pattern.permute.xlu0 0
            %979 = vperm.xlu0 %978, %v909
            %v980 = vpop.permute.xlu0 %979
            %982 = vset.pattern.permute.xlu0 0
            %983 = vperm.xlu0 %982, %v910
            %v984 = vpop.permute.xlu0 %983
            %986 = vset.pattern.permute.xlu0 0
            %987 = vperm.xlu0 %986, %v911
            %v988 = vpop.permute.xlu0 %987
            %990 = vset.pattern.permute.xlu0 0
            %991 = vperm.xlu0 %990, %v912
            %v992 = vpop.permute.xlu0 %991
            %v994 = vmul.f32 %v974, %v980
            %v995 = vmul.f32 %v975, %v984
            %v996 = vmul.f32 %v976, %v988
            %v997 = vmul.f32 %v977, %v992
            %998 = vrot.lane.b32.xlu0 %v905, 124
            %v999 = vpop.permute.xlu0 %998
            %1000 = vrot.lane.b32.xlu0 %v906, 124
            %v1001 = vpop.permute.xlu0 %1000
            %1002 = vrot.lane.b32.xlu0 %v907, 124
            %v1003 = vpop.permute.xlu0 %1002
            %1004 = vrot.lane.b32.xlu0 %v908, 124
            %v1005 = vpop.permute.xlu0 %1004
            %vm1006 = vcmp.lt.s32.totalorder %v607, 124
            %v1007 = vsel %vm1006, 1, 0
            %vm1008 = vcmp.eq.s32.totalorder %v1007, 1
            %v1009 = vsel %vm1008, %v999, 0.0
            %v1010 = vsel %vm1008, %v1001, 0.0
            %v1011 = vsel %vm1008, %v1003, 0.0
            %v1012 = vsel %vm1008, %v1005, 0.0
            %1013 = vset.pattern.permute.xlu0 2
            %1014 = vperm.xlu0 %1013, %v909
            %v1015 = vpop.permute.xlu0 %1014
            %1017 = vset.pattern.permute.xlu0 2
            %1018 = vperm.xlu0 %1017, %v910
            %v1019 = vpop.permute.xlu0 %1018
            %1021 = vset.pattern.permute.xlu0 2
            %1022 = vperm.xlu0 %1021, %v911
            %v1023 = vpop.permute.xlu0 %1022
            %1025 = vset.pattern.permute.xlu0 2
            %1026 = vperm.xlu0 %1025, %v912
            %v1027 = vpop.permute.xlu0 %1026
            %v1029 = vmul.f32 %v1009, %v1015
            %v1030 = vmul.f32 %v1010, %v1019
            %v1031 = vmul.f32 %v1011, %v1023
            %v1032 = vmul.f32 %v1012, %v1027
            %v1033 = vadd.f32 %v994, %v1029
            %v1034 = vadd.f32 %v995, %v1030
            %v1035 = vadd.f32 %v996, %v1031
            %v1036 = vadd.f32 %v997, %v1032
          $region88: #{tpu_custom_call.1} parent=83 // pred_fallthru
            %v1037 = vphi 0, %v1033
            %v1038 = vphi 0, %v1034
            %v1039 = vphi 0, %v1035
            %v1040 = vphi 0, %v1036
          %p1041 = pneg %p959
          // Predicated region
          $region89: #{tpu_custom_call.1} parent=83 // pred_check
            _
          $region90: #{tpu_custom_call.1} parent=83 // pred_check_branch
            %1043 = sbr.rel (%p959) target = $region92
          $region91: #{tpu_custom_call.1} parent=83 // pred_region
            %1044 = vrot.lane.b32.xlu0 %v905, 2
            %v1045 = vpop.permute.xlu0 %1044
            %1046 = vrot.lane.b32.xlu0 %v906, 2
            %v1047 = vpop.permute.xlu0 %1046
            %1048 = vrot.lane.b32.xlu0 %v907, 2
            %v1049 = vpop.permute.xlu0 %1048
            %1050 = vrot.lane.b32.xlu0 %v908, 2
            %v1051 = vpop.permute.xlu0 %1050
            %vm1052 = vcmp.ge.s32.totalorder %v607, 2
            %v1053 = vsel %vm1052, 1, 0
            %vm1054 = vcmp.eq.s32.totalorder %v1053, 1
            %v1055 = vsel %vm1054, %v1045, 0.0
            %v1056 = vsel %vm1054, %v1047, 0.0
            %v1057 = vsel %vm1054, %v1049, 0.0
            %v1058 = vsel %vm1054, %v1051, 0.0
            %1059 = vset.pattern.permute.xlu0 0
            %1060 = vperm.xlu0 %1059, %v909
            %v1061 = vpop.permute.xlu0 %1060
            %1063 = vset.pattern.permute.xlu0 0
            %1064 = vperm.xlu0 %1063, %v910
            %v1065 = vpop.permute.xlu0 %1064
            %1067 = vset.pattern.permute.xlu0 0
            %1068 = vperm.xlu0 %1067, %v911
            %v1069 = vpop.permute.xlu0 %1068
            %1071 = vset.pattern.permute.xlu0 0
            %1072 = vperm.xlu0 %1071, %v912
            %v1073 = vpop.permute.xlu0 %1072
            %v1075 = vmul.f32 %v1055, %v1061
            %v1076 = vmul.f32 %v1056, %v1065
            %v1077 = vmul.f32 %v1057, %v1069
            %v1078 = vmul.f32 %v1058, %v1073
            %1079 = vrot.lane.b32.xlu0 %v905, 126
            %v1080 = vpop.permute.xlu0 %1079
            %1081 = vrot.lane.b32.xlu0 %v906, 126
            %v1082 = vpop.permute.xlu0 %1081
            %1083 = vrot.lane.b32.xlu0 %v907, 126
            %v1084 = vpop.permute.xlu0 %1083
            %1085 = vrot.lane.b32.xlu0 %v908, 126
            %v1086 = vpop.permute.xlu0 %1085
            %vm1087 = vcmp.lt.s32.totalorder %v607, 126
            %v1088 = vsel %vm1087, 1, 0
            %vm1089 = vcmp.eq.s32.totalorder %v1088, 1
            %v1090 = vsel %vm1089, %v1080, 0.0
            %v1091 = vsel %vm1089, %v1082, 0.0
            %v1092 = vsel %vm1089, %v1084, 0.0
            %v1093 = vsel %vm1089, %v1086, 0.0
            %1094 = vset.pattern.permute.xlu0 2
            %1095 = vperm.xlu0 %1094, %v909
            %v1096 = vpop.permute.xlu0 %1095
            %1098 = vset.pattern.permute.xlu0 2
            %1099 = vperm.xlu0 %1098, %v910
            %v1100 = vpop.permute.xlu0 %1099
            %1102 = vset.pattern.permute.xlu0 2
            %1103 = vperm.xlu0 %1102, %v911
            %v1104 = vpop.permute.xlu0 %1103
            %1106 = vset.pattern.permute.xlu0 2
            %1107 = vperm.xlu0 %1106, %v912
            %v1108 = vpop.permute.xlu0 %1107
            %v1110 = vmul.f32 %v1090, %v1096
            %v1111 = vmul.f32 %v1091, %v1100
            %v1112 = vmul.f32 %v1092, %v1104
            %v1113 = vmul.f32 %v1093, %v1108
            %v1114 = vadd.f32 %v1075, %v1110
            %v1115 = vadd.f32 %v1076, %v1111
            %v1116 = vadd.f32 %v1077, %v1112
            %v1117 = vadd.f32 %v1078, %v1113
          $region92: #{tpu_custom_call.1} parent=83 // pred_fallthru
            %v1118 = vphi %v1037, %v1114
            %v1119 = vphi %v1038, %v1115
            %v1120 = vphi %v1039, %v1116
            %v1121 = vphi %v1040, %v1117
        $region84: #{tpu_custom_call.1} parent=71 // pred_fallthru
          %v1122 = vphi 0, %v1118
          %v1123 = vphi 0, %v1119
          %v1124 = vphi 0, %v1120
          %v1125 = vphi 0, %v1121
        %p1126 = pneg %p954
        // Predicated region
        $region93: #{tpu_custom_call.1} parent=71 // pred_check
          _
        $region94: #{tpu_custom_call.1} parent=71 // pred_check_branch
          %1128 = sbr.rel (%p954) target = $region96
        $region95: #{tpu_custom_call.1} parent=71 // pred_region
          %1129 = vrot.lane.b32.xlu0 %v905, 1
          %v1130 = vpop.permute.xlu0 %1129
          %1131 = vrot.lane.b32.xlu0 %v906, 1
          %v1132 = vpop.permute.xlu0 %1131
          %1133 = vrot.lane.b32.xlu0 %v907, 1
          %v1134 = vpop.permute.xlu0 %1133
          %1135 = vrot.lane.b32.xlu0 %v908, 1
          %v1136 = vpop.permute.xlu0 %1135
          %vm1137 = vcmp.ge.s32.totalorder %v607, 1
          %v1138 = vsel %vm1137, 1, 0
          %vm1139 = vcmp.eq.s32.totalorder %v1138, 1
          %v1140 = vsel %vm1139, %v1130, 0.0
          %v1141 = vsel %vm1139, %v1132, 0.0
          %v1142 = vsel %vm1139, %v1134, 0.0
          %v1143 = vsel %vm1139, %v1136, 0.0
          %1144 = vset.pattern.permute.xlu0 0
          %1145 = vperm.xlu0 %1144, %v909
          %v1146 = vpop.permute.xlu0 %1145
          %1148 = vset.pattern.permute.xlu0 0
          %1149 = vperm.xlu0 %1148, %v910
          %v1150 = vpop.permute.xlu0 %1149
          %1152 = vset.pattern.permute.xlu0 0
          %1153 = vperm.xlu0 %1152, %v911
          %v1154 = vpop.permute.xlu0 %1153
          %1156 = vset.pattern.permute.xlu0 0
          %1157 = vperm.xlu0 %1156, %v912
          %v1158 = vpop.permute.xlu0 %1157
          %v1160 = vmul.f32 %v1140, %v1146
          %v1161 = vmul.f32 %v1141, %v1150
          %v1162 = vmul.f32 %v1142, %v1154
          %v1163 = vmul.f32 %v1143, %v1158
          %1164 = vrot.lane.b32.xlu0 %v905, 127
          %v1165 = vpop.permute.xlu0 %1164
          %1166 = vrot.lane.b32.xlu0 %v906, 127
          %v1167 = vpop.permute.xlu0 %1166
          %1168 = vrot.lane.b32.xlu0 %v907, 127
          %v1169 = vpop.permute.xlu0 %1168
          %1170 = vrot.lane.b32.xlu0 %v908, 127
          %v1171 = vpop.permute.xlu0 %1170
          %vm1172 = vcmp.lt.s32.totalorder %v607, 127
          %v1173 = vsel %vm1172, 1, 0
          %vm1174 = vcmp.eq.s32.totalorder %v1173, 1
          %v1175 = vsel %vm1174, %v1165, 0.0
          %v1176 = vsel %vm1174, %v1167, 0.0
          %v1177 = vsel %vm1174, %v1169, 0.0
          %v1178 = vsel %vm1174, %v1171, 0.0
          %1179 = vset.pattern.permute.xlu0 2
          %1180 = vperm.xlu0 %1179, %v909
          %v1181 = vpop.permute.xlu0 %1180
          %1183 = vset.pattern.permute.xlu0 2
          %1184 = vperm.xlu0 %1183, %v910
          %v1185 = vpop.permute.xlu0 %1184
          %1187 = vset.pattern.permute.xlu0 2
          %1188 = vperm.xlu0 %1187, %v911
          %v1189 = vpop.permute.xlu0 %1188
          %1191 = vset.pattern.permute.xlu0 2
          %1192 = vperm.xlu0 %1191, %v912
          %v1193 = vpop.permute.xlu0 %1192
          %v1195 = vmul.f32 %v1175, %v1181
          %v1196 = vmul.f32 %v1176, %v1185
          %v1197 = vmul.f32 %v1177, %v1189
          %v1198 = vmul.f32 %v1178, %v1193
          %v1199 = vadd.f32 %v1160, %v1195
          %v1200 = vadd.f32 %v1161, %v1196
          %v1201 = vadd.f32 %v1162, %v1197
          %v1202 = vadd.f32 %v1163, %v1198
        $region96: #{tpu_custom_call.1} parent=71 // pred_fallthru
          %v1203 = vphi %v1122, %v1199
          %v1204 = vphi %v1123, %v1200
          %v1205 = vphi %v1124, %v1201
          %v1206 = vphi %v1125, %v1202
        %v1207 = vadd.f32 %v933, %v1203
        %v1208 = vadd.f32 %v934, %v1204
        %v1209 = vadd.f32 %v935, %v1205
        %v1210 = vadd.f32 %v936, %v1206
        %v1211 = vld [vmem:[%s594] sm:$0xff]
        %v1212 = vld [vmem:[%s594 + $0x8] sm:$0xff]
        %v1213 = vld [vmem:[%s594 + $0x10] sm:$0xff]
        %v1214 = vld [vmem:[%s594 + $0x18] sm:$0xff]
        %1216 = vset.pattern.permute.xlu0 0
        %1217 = vperm.xlu0 %1216, %v1211
        %v1218 = vpop.permute.xlu0 %1217
        %1221 = vset.pattern.permute.xlu0 0
        %1222 = vperm.xlu0 %1221, %v1212
        %v1223 = vpop.permute.xlu0 %1222
        %1226 = vset.pattern.permute.xlu0 0
        %1227 = vperm.xlu0 %1226, %v1213
        %v1228 = vpop.permute.xlu0 %1227
        %1231 = vset.pattern.permute.xlu0 0
        %1232 = vperm.xlu0 %1231, %v1214
        %v1233 = vpop.permute.xlu0 %1232
        %v1235 = vadd.f32 %v1207, %v1218
        %v1236 = vadd.f32 %v1208, %v1223
        %v1237 = vadd.f32 %v1209, %v1228
        %v1238 = vadd.f32 %v1210, %v1233
        %vm1239 = vcmp.gt.f32.partialorder %v1235, 0.0
        %vm1240 = vcmp.gt.f32.partialorder %v1236, 0.0
        %vm1241 = vcmp.gt.f32.partialorder %v1237, 0.0
        %vm1242 = vcmp.gt.f32.partialorder %v1238, 0.0
        %v1243 = vstv %s723
        %v1244 = vmul.f32 %v1243, %v1235
        %v1245 = vmul.f32 %v1243, %v1236
        %v1246 = vmul.f32 %v1243, %v1237
        %v1247 = vmul.f32 %v1243, %v1238
        %v1248 = vsel %vm1239, %v1235, %v1244
        %v1249 = vsel %vm1240, %v1236, %v1245
        %v1250 = vsel %vm1241, %v1237, %v1246
        %v1251 = vsel %vm1242, %v1238, %v1247
        %v1252 = vadd.f32 %v1248, %v1249
        %v1253 = vadd.f32 %v1252, %v1250
        %v1254 = vadd.f32 %v1253, %v1251
        %1255 = vadd.xlane.f32.xlu0 %v1254
        %v1256 = vpop.xlane.xlu0 %1255
        %v1257 = vrot.slane %v1256, 4
        %v1258 = vadd.f32 %v1256, %v1257
        %v1259 = vrot.slane %v1258, 2
        %v1260 = vadd.f32 %v1258, %v1259
        %v1261 = vrot.slane %v1260, 1
        %v1262 = vadd.f32 %v1260, %v1261
        %s1263 = vtos %v1262
        %v1264 = vmul.f32 %v1248, %v1248
        %v1265 = vmul.f32 %v1249, %v1249
        %v1266 = vmul.f32 %v1250, %v1250
        %v1267 = vmul.f32 %v1251, %v1251
        %v1268 = vadd.f32 %v1264, %v1265
        %v1269 = vadd.f32 %v1268, %v1266
        %v1270 = vadd.f32 %v1269, %v1267
        %1271 = vadd.xlane.f32.xlu0 %v1270
        %v1272 = vpop.xlane.xlu0 %1271
        %v1273 = vrot.slane %v1272, 4
        %v1274 = vadd.f32 %v1272, %v1273
        %v1275 = vrot.slane %v1274, 2
        %v1276 = vadd.f32 %v1274, %v1275
        %v1277 = vrot.slane %v1276, 1
        %v1278 = vadd.f32 %v1276, %v1277
        %s1279 = vtos %v1278
        %s1280 = smul.f32 %s1263, 0.00024414063
        %s1281 = smul.f32 %s1279, 0.00024414063
        %s1282 = smul.f32 %s1280, %s1280
        %s1283 = ssub.f32 %s1281, %s1282
        %s1284 = smax.f32 %s1283, 0.0
        %v1285 = vstv %s1280
        %v1286 = vsub.f32 %v1248, %v1285
        %v1287 = vsub.f32 %v1249, %v1285
        %v1288 = vsub.f32 %v1250, %v1285
        %v1289 = vsub.f32 %v1251, %v1285
        %s1290 = sadd.f32 %s1284, 1e-08
        %v1291 = vstv %s1290
        %v1292 = vrsqrt.pop %v1291
        %s1293 = vtos %v1292
        %v1294 = vstv %s1293
        %v1295 = vmul.f32 %v1286, %v1294
        %v1296 = vmul.f32 %v1287, %v1294
        %v1297 = vmul.f32 %v1288, %v1294
        %v1298 = vmul.f32 %v1289, %v1294
        %v1299 = vld [vmem:[%s599] sm:$0xf]
        %v1300 = vld [vmem:[%s599 + $0x4] sm:$0xf]
        %v1301 = vld [vmem:[%s599 + $0x8] sm:$0xf]
        %v1302 = vld [vmem:[%s599 + $0xc] sm:$0xf]
        %v1303 = vpack.c.bf16 %v1296, %v1295
        %v1304 = vpack.c.bf16 %v1298, %v1297
        %v1305 = vld [vmem:[%s604] sm:$0xff]
        %v1306 = vld [vmem:[%s604 + $0x8] sm:$0xff]
        %v1307 = vld [vmem:[%s604 + $0x10] sm:$0xff]
        %v1308 = vld [vmem:[%s604 + $0x18] sm:$0xff]
        %1310 = vset.pattern.permute.xlu0 0
        %1311 = vperm.xlu0 %1310, %v1305
        %v1312 = vpop.permute.xlu0 %1311
        %1315 = vset.pattern.permute.xlu0 0
        %1316 = vperm.xlu0 %1315, %v1306
        %v1317 = vpop.permute.xlu0 %1316
        %1320 = vset.pattern.permute.xlu0 0
        %1321 = vperm.xlu0 %1320, %v1307
        %v1322 = vpop.permute.xlu0 %1321
        %1325 = vset.pattern.permute.xlu0 0
        %1326 = vperm.xlu0 %1325, %v1308
        %v1327 = vpop.permute.xlu0 %1326
        %v1333 = vunpack.c.l.b16 %v1299
        %v1334 = vunpack.c.l.b16 %v1300
        %v1335 = vunpack.c.l.b16 %v1301
        %v1336 = vunpack.c.l.b16 %v1302
        %v1337 = vpack.c.b16 %v1334, %v1333
        %v1338 = vpack.c.b16 %v1336, %v1335
        %vm1339 = vcmask 261120
        %v1341 = vsel %vm1339, %v1337, 0
        %v1344 = vsel %vm1339, %v1338, 0
        %1346 = vmatprep.subr.bf16.mxu0 0
        %1347 = vmatpush1.bf16.msra.mxu0 %v1303
        %1348 = vmatprep.subr.bf16.mxu0 0
        %1349 = vmatpush1.bf16.msra.mxu0 %v1304
        %1350 = vmatprep.subr.bf16.mxu0 0
        %1351 = vmatpush1.bf16.msra.mxu0 0
        %1352 = vmatprep.subr.bf16.mxu0 0
        %1353 = vmatpush1.bf16.msra.mxu0 0
        %1354 = vmatprep.subr.bf16.mxu0 0
        %1355 = vmatpush1.bf16.msra.mxu0 0
        %1356 = vmatprep.subr.bf16.mxu0 0
        %1357 = vmatpush1.bf16.msra.mxu0 0
        %1358 = vmatprep.subr.bf16.mxu0 0
        %1359 = vmatpush1.bf16.msra.mxu0 0
        %1360 = vmatprep.subr.bf16.mxu0 0
        %1361 = vmatpush1.bf16.msra.mxu0 0
        %1362 = vmatprep.subr.bf16.mxu0 0
        %1363 = vmatpush1.bf16.msra.mxu0 0
        %1364 = vmatprep.subr.bf16.mxu0 0
        %1365 = vmatpush1.bf16.msra.mxu0 0
        %1366 = vmatprep.subr.bf16.mxu0 0
        %1367 = vmatpush1.bf16.msra.mxu0 0
        %1368 = vmatprep.subr.bf16.mxu0 0
        %1369 = vmatpush1.bf16.msra.mxu0 0
        %1370 = vmatprep.subr.bf16.mxu0 0
        %1371 = vmatpush1.bf16.msra.mxu0 0
        %1372 = vmatprep.subr.bf16.mxu0 0
        %1373 = vmatpush1.bf16.msra.mxu0 0
        %1374 = vmatprep.subr.bf16.mxu0 0
        %1375 = vmatpush1.bf16.msra.mxu0 0
        %1376 = vmatprep.subr.bf16.mxu0 0
        %1377 = vmatpush1.bf16.msra.mxu0 0
        %1378 = vmatprep.mubr.bf16.mxu0 0
        %1379 = vmatmul.mubr.bf16.gmra.mrb[0].mxu0 %v1341
        %v1380 = vpop.f32.mrb[0].mxu0
        %v1381 = vadd.f32 %v1312, %v1380
        %v1382 = vpop.f32.mrb[0].mxu0
        %v1383 = vpop.f32.mrb[0].mxu0
        %v1384 = vadd.f32 %v1317, %v1383
        %v1385 = vpop.f32.mrb[0].mxu0
        %1386 = vmatprep.mubr.bf16.mxu0 0
        %1387 = vmatmul.mubr.bf16.gmra.mrb[0].mxu0 %v1344
        %v1388 = vpop.f32.mrb[0].mxu0
        %v1389 = vadd.f32 %v1322, %v1388
        %v1390 = vpop.f32.mrb[0].mxu0
        %v1391 = vpop.f32.mrb[0].mxu0
        %v1392 = vadd.f32 %v1327, %v1391
        %v1393 = vpop.f32.mrb[0].mxu0
        %1394 = vdwg.mxu0
        %v1395 = vld [vmem:[#allocation3] sm:$0xff]
        %v1396 = vld [vmem:[#allocation3 + $0x8] sm:$0xff]
        %v1397 = vadd.f32 %v1395, %v1389
        %v1398 = vadd.f32 %v1396, %v1392
        %1399 = vst [vmem:[#allocation3] sm:$0xff] %v1397
        %1400 = vst [vmem:[#allocation3 + $0x8] sm:$0xff] %v1398
        %p1401 = scmp.lt.s32.totalorder %s33, 5
        // Predicated region
        $region97: #{tpu_custom_call.1} parent=71 // pred_check
          %p1402 = pneg %p1401
        $region98: #{tpu_custom_call.1} parent=71 // pred_check_branch
          %1404 = sbr.rel (%p1402) target = $region100
        $region99: #{tpu_custom_call.1} parent=71 // pred_region
          %v1405 = vadd.f32 %v724, %v1381
          %v1406 = vadd.f32 %v725, %v1384
          %1407 = vst [vmem:[#allocation2] sm:$0xff] %v1405
          %1408 = vst [vmem:[#allocation2 + $0x8] sm:$0xff] %v1406
        $region100: #{tpu_custom_call.1} parent=71 // pred_fallthru
          _
        %p1409 = scmp.eq.s32.totalorder %s33, 5
        // Predicated region
        $region101: #{tpu_custom_call.1} parent=71 // pred_check
          %p1410 = pneg %p1409
        $region102: #{tpu_custom_call.1} parent=71 // pred_check_branch
          %1412 = sbr.rel (%p1410) target = $region104
        $region103: #{tpu_custom_call.1} parent=71 // pred_region
          %v1413 = vld [vmem:[#allocation3] sm:$0xff]
          %v1414 = vld [vmem:[#allocation3 + $0x8] sm:$0xff]
          %s1415 = sld [smem:[#allocation4 + $0xc]]
          %vm1416 = vcmp.gt.f32.partialorder %v1413, 0.0
          %vm1417 = vcmp.gt.f32.partialorder %v1414, 0.0
          %v1418 = vstv %s1415
          %v1419 = vmul.f32 %v1418, %v1413
          %v1420 = vmul.f32 %v1418, %v1414
          %v1421 = vsel %vm1416, %v1413, %v1419
          %v1422 = vsel %vm1417, %v1414, %v1420
          %v1423 = vld [vmem:[%s4] sm:$0xf]
          %v1424 = vld [vmem:[%s4 + $0x4] sm:$0xf]
          %v1425 = vpack.c.bf16 %v1422, %v1421
          %v1426 = vld [vmem:[%s5] sm:$0xff]
          %v1427 = vld [vmem:[%s5 + $0x8] sm:$0xff]
          %1429 = vset.pattern.permute.xlu0 0
          %1430 = vperm.xlu0 %1429, %v1426
          %v1431 = vpop.permute.xlu0 %1430
          %1434 = vset.pattern.permute.xlu0 0
          %1435 = vperm.xlu0 %1434, %v1427
          %v1436 = vpop.permute.xlu0 %1435
          %v1440 = vunpack.c.l.b16 %v1423
          %v1441 = vunpack.c.l.b16 %v1424
          %v1442 = vpack.c.b16 %v1441, %v1440
          %v1444 = vsel %vm765, %v1442, 0
          %1446 = vmatprep.subr.bf16.mxu0 0
          %1447 = vmatpush1.bf16.msra.mxu0 %v1425
          %1448 = vmatprep.subr.bf16.mxu0 0
          %1449 = vmatpush1.bf16.msra.mxu0 0
          %1450 = vmatprep.subr.bf16.mxu0 0
          %1451 = vmatpush1.bf16.msra.mxu0 0
          %1452 = vmatprep.subr.bf16.mxu0 0
          %1453 = vmatpush1.bf16.msra.mxu0 0
          %1454 = vmatprep.subr.bf16.mxu0 0
          %1455 = vmatpush1.bf16.msra.mxu0 0
          %1456 = vmatprep.subr.bf16.mxu0 0
          %1457 = vmatpush1.bf16.msra.mxu0 0
          %1458 = vmatprep.subr.bf16.mxu0 0
          %1459 = vmatpush1.bf16.msra.mxu0 0
          %1460 = vmatprep.subr.bf16.mxu0 0
          %1461 = vmatpush1.bf16.msra.mxu0 0
          %1462 = vmatprep.subr.bf16.mxu0 0
          %1463 = vmatpush1.bf16.msra.mxu0 0
          %1464 = vmatprep.subr.bf16.mxu0 0
          %1465 = vmatpush1.bf16.msra.mxu0 0
          %1466 = vmatprep.subr.bf16.mxu0 0
          %1467 = vmatpush1.bf16.msra.mxu0 0
          %1468 = vmatprep.subr.bf16.mxu0 0
          %1469 = vmatpush1.bf16.msra.mxu0 0
          %1470 = vmatprep.subr.bf16.mxu0 0
          %1471 = vmatpush1.bf16.msra.mxu0 0
          %1472 = vmatprep.subr.bf16.mxu0 0
          %1473 = vmatpush1.bf16.msra.mxu0 0
          %1474 = vmatprep.subr.bf16.mxu0 0
          %1475 = vmatpush1.bf16.msra.mxu0 0
          %1476 = vmatprep.subr.bf16.mxu0 0
          %1477 = vmatpush1.bf16.msra.mxu0 0
          %1478 = vmatprep.mubr.bf16.mxu0 0
          %1479 = vmatmul.mubr.bf16.gmra.mrb[0].mxu0 %v1444
          %v1480 = vpop.f32.mrb[0].mxu0
          %v1481 = vadd.f32 %v1431, %v1480
          %v1482 = vpop.f32.mrb[0].mxu0
          %v1483 = vpop.f32.mrb[0].mxu0
          %v1484 = vadd.f32 %v1436, %v1483
          %v1485 = vpop.f32.mrb[0].mxu0
          %1486 = vdwg.mxu0
          %1487 = vst [vmem:[%s564] sm:$0xff] %v1481
          %1488 = vst [vmem:[%s564 + $0x8] sm:$0xff] %v1484
        $region104: #{tpu_custom_call.1} parent=71 // pred_fallthru
          _
        %s1489 = sand.u32 %s361, 1
        %s1490 = scalar_lea.sflag [#allocation5], %s1489
        %s1491 = sand.u32 %s361, 1
        %s1492 = smul.addr %s1491, 16
        %s1493 = scalar_lea.vmem [#allocation7], %s1492
        // Predicated region
        $region105: #{tpu_custom_call.1} parent=71 // pred_check
          %p1494 = pneg %p371
        $region106: #{tpu_custom_call.1} parent=71 // pred_check_branch
          %1496 = sbr.rel (%p1494) target = $region108
        $region107: #{tpu_custom_call.1} parent=71 // pred_region
          %s1498 = ssub.s32 256, 256
          %1499 = vsyncadd %s1490, %s1498
          %s1500 = smul.addr %s32, 2
          %s1501 = smul.addr %s1500, 128
          %s1502 = scalar_lea.hbm %s13, %s1501
          %s1503 = sshll.u32 %s1493, 4
          %s1504 = int_to_ptr.vmem [resolvable:$true] %s1503
          %1509 = dma.vmem_to_hbm [thread:$0]  %s1504, 256, %s1502, %s1490, 128, 128, 8
        $region108: #{tpu_custom_call.1} parent=71 // pred_fallthru
          _
      $region72: #{tpu_custom_call.1} parent=5 // pred_fallthru
        _
      %p1510 = scmp.le.s32.totalorder 2, %s23
      // Predicated region
      $region109: #{tpu_custom_call.1} parent=5 // pred_check
        %p1511 = pneg %p1510
      $region110: #{tpu_custom_call.1} parent=5 // pred_check_branch
        %1513 = sbr.rel (%p1511) target = $region112
      $region111: #{tpu_custom_call.1} parent=5 // pred_region
        %s1514 = ssub.s32 %s23, 2
        // Predicated region
        $region113: #{tpu_custom_call.1} parent=111 // pred_check
          %p1515 = pneg %p377
        $region114: #{tpu_custom_call.1} parent=111 // pred_check_branch
          %1517 = sbr.rel (%p1515) target = $region116
        $region115: #{tpu_custom_call.1} parent=111 // pred_region
          %s1518 = sand.u32 %s362, 1
          %s1519 = scalar_lea.sflag [#allocation5], %s1518
          %s1520 = sand.u32 %s362, 1
          %s1521 = smul.addr %s1520, 16
          %s1522 = scalar_lea.vmem [#allocation7], %s1521
          %1523 = dma.done %s1519, 256
        $region116: #{tpu_custom_call.1} parent=111 // pred_fallthru
          _
      $region112: #{tpu_custom_call.1} parent=5 // pred_fallthru
        _
    $region6: #{tpu_custom_call.1} parent=1 // loop_footer
      %s27 = sadd.s32 1, %s23
    $region7: #{tpu_custom_call.1} parent=1 // loop_footer_branch
      %22 = sbr.rel target = $region3
    $region8: #{tpu_custom_call.1} parent=1 // loop_exit
      _
    %1524 = vsyncpa [#allocation5], 1
    %s1525 = scalar_lea.sflag [#allocation5], 1
    %1526 = vsyncpa %s1525, 1
    %1527 = vsyncpa [#allocation6], 1
    %s1528 = scalar_lea.sflag [#allocation6], 1
    %1529 = vsyncpa %s1528, 1

</llo_original>
